<compile_context>
chip_gen: v7x
topology: tpu7x:2x2x1
jax: 0.10.0
libtpu: 0.0.40
codegen_flags: <defaults>
</compile_context>

<pallas_src>
import jax
import jax.numpy as jnp
from jax.experimental import pallas as pl
from jax.experimental.pallas import tpu as pltpu


# -----------------------------------------------------------------------------
# Kernel
# -----------------------------------------------------------------------------
def _encoder_kernel(
    x_ref,
    w1_ref, b1_ref,
    w2_ref, b2_ref,
    w3_ref, b3_ref,
    w4_ref, b4_ref,
    w5_ref, b5_ref,
    wh_ref, bh_ref,          # fused [mu | log_var | zero-pad] head
    out_ref,                 # (tb, head_dim) lane-dense fused output
):
    def linear_relu(h_bf16, w_ref, b_ref):
        # bf16 x bf16 matmul with f32 accumulation on the MXU.
        y = jnp.dot(h_bf16, w_ref[...], preferred_element_type=jnp.float32)
        y = jnp.maximum(y + b_ref[...], 0.0)     # bias-add + ReLU in f32 (VPU)
        return y.astype(jnp.bfloat16)            # feed next layer in bf16

    h = x_ref[...]
    if h.dtype != jnp.bfloat16:                  # trace-time check only; the fast
        h = h.astype(jnp.bfloat16)               # path feeds x as bf16 (no cast)
    h = linear_relu(h, w1_ref, b1_ref)           # 784 -> 392, ReLU
    h = linear_relu(h, w2_ref, b2_ref)           # 392 -> 196, ReLU
    h = linear_relu(h, w3_ref, b3_ref)           # 196 ->  98, ReLU
    h = linear_relu(h, w4_ref, b4_ref)           #  98 ->  48, ReLU
    z = linear_relu(h, w5_ref, b5_ref)           #  48 -> latent, ReLU

    # Fused read-out heads: one matmul producing [mu | log_var | 0-pad].
    head = jnp.dot(z, wh_ref[...], preferred_element_type=jnp.float32) + bh_ref[...]
    out_ref[...] = head.astype(out_ref.dtype)


# -----------------------------------------------------------------------------
# Wrapper
# -----------------------------------------------------------------------------
def _round_up(n, m):
    return ((n + m - 1) // m) * m


def _pick_batch_tile(padded_batch, batch_tile):
    """Largest 16-aligned divisor of padded_batch that is <= batch_tile,
    preferring a choice that yields >= 2 grid steps (v7x megacore)."""
    hi = min(_round_up(batch_tile, 16), padded_batch)
    cands = [t for t in range(16, hi + 1, 16) if padded_batch % t == 0]
    if not cands:
        return padded_batch
    multi = [t for t in cands if padded_batch // t >= 2]
    return max(multi) if multi else max(cands)


def encoder_forward(x, params, *, batch_tile=1024):
    """x: (batch, 784), ideally bf16 straight from the producer.
    params: dict of weights/biases. Returns (mu, log_var) in f32."""
    batch, in_dim = x.shape
    latent = params["w5"].shape[1]
    sub_dim = params["w_mu"].shape[1]

    # --- operands: bf16 weights, f32 biases, fused lane-dense head ------------
    ws = [params[f"w{i+1}"].astype(jnp.bfloat16) for i in range(5)]
    bs = [params[f"b{i+1}"].astype(jnp.float32) for i in range(5)]

    out_cols = 2 * sub_dim
    head_dim = _round_up(out_cols, 128)          # lane-dense output slab
    w_head = jnp.concatenate([params["w_mu"], params["w_lv"]], axis=1)
    b_head = jnp.concatenate([params["b_mu"], params["b_lv"]], axis=1)
    if head_dim != out_cols:
        w_head = jnp.pad(w_head, ((0, 0), (0, head_dim - out_cols)))
        b_head = jnp.pad(b_head, ((0, 0), (0, head_dim - out_cols)))
    w_head = w_head.astype(jnp.bfloat16)
    b_head = b_head.astype(jnp.float32)

    # --- batch tiling (no full-x pad pass in the common case) -----------------
    padded_batch = _round_up(batch, 16)
    tb = _pick_batch_tile(padded_batch, batch_tile)
    if padded_batch != batch:
        # TODO(synk): fold this pad into the upstream producer that already
        # materializes x (here it only triggers when batch % 16 != 0).
        x = jnp.pad(x, ((0, padded_batch - batch), (0, 0)))
    grid = (padded_batch // tb,)

    operands = [x]
    in_specs = [pl.BlockSpec((tb, in_dim), lambda i: (i, 0))]

    # Weights / biases: full-array blocks with a constant index_map so they are
    # DMA'd once and stay VMEM-resident across all batch tiles.
    def _resident_spec(arr):
        return pl.BlockSpec(arr.shape, lambda i: (0, 0))

    for w, b in zip(ws, bs):
        operands += [w, b]
        in_specs += [_resident_spec(w), _resident_spec(b)]
    operands += [w_head, b_head]
    in_specs += [_resident_spec(w_head), _resident_spec(b_head)]

    out_specs = pl.BlockSpec((tb, head_dim), lambda i: (i, 0))
    out_shape = jax.ShapeDtypeStruct((padded_batch, head_dim), jnp.float32)

    # Advisory cost estimate.
    dims = [in_dim] + [w.shape[1] for w in ws] + [head_dim]
    flops = 2 * padded_batch * sum(dims[i] * dims[i + 1] for i in range(len(dims) - 1))
    weight_bytes = sum(int(w.size) * 2 + int(b.size) * 4 for w, b in zip(ws, bs))
    weight_bytes += int(w_head.size) * 2 + int(b_head.size) * 4
    bytes_accessed = (weight_bytes
                      + int(x.size) * x.dtype.itemsize
                      + padded_batch * head_dim * 4)
    cost = pl.CostEstimate(flops=flops, transcendentals=0,
                           bytes_accessed=bytes_accessed)

    fused = pl.pallas_call(
        _encoder_kernel,
        out_shape=out_shape,
        grid=grid,
        in_specs=in_specs,
        out_specs=out_specs,
        compiler_params=pltpu.CompilerParams(
            dimension_semantics=("parallel",)),
        cost_estimate=cost,
    )(*operands)

    fused = fused[:batch, :out_cols]
    mu = fused[:, :sub_dim]
    log_var = fused[:, sub_dim:]
    return mu, log_var


# -----------------------------------------------------------------------------
# Deterministic parameter init (PyTorch nn.Linear-style uniform init)
# -----------------------------------------------------------------------------
def init_params(key, latent_vector_dim, sub_dim):
    dims = [28 * 28, 392, 196, 98, 48, latent_vector_dim]
    params = {}

    def linear_init(k, fan_in, fan_out):
        kw, kb = jax.random.split(k)
        bound = 1.0 / jnp.sqrt(fan_in)
        w = jax.random.uniform(kw, (fan_in, fan_out), jnp.float32, -bound, bound)
        b = jax.random.uniform(kb, (1, fan_out), jnp.float32, -bound, bound)
        return w, b

    keys = jax.random.split(key, 7)
    for i in range(5):
        w, b = linear_init(keys[i], dims[i], dims[i + 1])
        params[f"w{i+1}"] = w
        params[f"b{i+1}"] = b

    params["w_mu"], params["b_mu"] = linear_init(keys[5], latent_vector_dim, sub_dim)
    params["w_lv"], params["b_lv"] = linear_init(keys[6], latent_vector_dim, sub_dim)
    return params


# -----------------------------------------------------------------------------
# Reference (plain JAX, f32) for sanity checking
# -----------------------------------------------------------------------------
def encoder_ref(x, p):
    h = x
    for i in range(5):
        h = jnp.maximum(h @ p[f"w{i+1}"] + p[f"b{i+1}"], 0.0)
    mu = h @ p["w_mu"] + p["b_mu"]
    lv = h @ p["w_lv"] + p["b_lv"]
    return mu, lv


if __name__ == "__main__":
    key = jax.random.PRNGKey(0)
    k_param, k_x = jax.random.split(key)

    batch = 32                      # multiple of 16 -> no pad, 2-step grid
    latent_vector_dim = 32
    sub_dim = 16

    params = init_params(k_param, latent_vector_dim, sub_dim)
    x_f32 = jax.random.normal(k_x, (batch, 28 * 28), jnp.float32)
    # Producer hands the activation stream in bf16 (fast path: no in-kernel cast,
    # half the per-step x DMA).
    x_bf16 = x_f32.astype(jnp.bfloat16)

    mu, log_var = encoder_forward(x_bf16, params)
    jax.block_until_ready((mu, log_var))

    mu_ref, lv_ref = encoder_ref(x_f32, params)
    assert mu.shape == (batch, sub_dim) and log_var.shape == (batch, sub_dim)
    # bf16 weights + bf16 activation stream -> loosened tolerance vs. f32 ref.
    assert jnp.allclose(mu, mu_ref, atol=5e-2, rtol=5e-2)
    assert jnp.allclose(log_var, lv_ref, atol=5e-2, rtol=5e-2)

    print("KERNEL_OK")
</pallas_src>

<mosaic_0001>
module attributes {stable_mosaic.version = 11 : i64} {
  func.func @_encoder_kernel(%arg0: i32, %arg1: memref<16x784xbf16, #tpu.memory_space<vmem>>, %arg2: memref<784x392xbf16, #tpu.memory_space<vmem>>, %arg3: memref<1x392xf32, #tpu.memory_space<vmem>>, %arg4: memref<392x196xbf16, #tpu.memory_space<vmem>>, %arg5: memref<1x196xf32, #tpu.memory_space<vmem>>, %arg6: memref<196x98xbf16, #tpu.memory_space<vmem>>, %arg7: memref<1x98xf32, #tpu.memory_space<vmem>>, %arg8: memref<98x48xbf16, #tpu.memory_space<vmem>>, %arg9: memref<1x48xf32, #tpu.memory_space<vmem>>, %arg10: memref<48x32xbf16, #tpu.memory_space<vmem>>, %arg11: memref<1x32xf32, #tpu.memory_space<vmem>>, %arg12: memref<32x128xbf16, #tpu.memory_space<vmem>>, %arg13: memref<1x128xf32, #tpu.memory_space<vmem>>, %arg14: memref<16x128xf32, #tpu.memory_space<vmem>>) attributes {dimension_semantics = [#tpu.dimension_semantics<parallel>], iteration_bounds = array<i64: 2>, scalar_prefetch = 0 : i64, scratch_operands = 0 : i64, tpu.core_type = #tpu.core_type<tc>, window_params = [{transform_indices = @transform_0, window_bounds = array<i64: 16, 784>}, {pipeline_mode = #tpu.pipeline_mode<synchronous>, transform_indices = @transform_1, window_bounds = array<i64: 784, 392>}, {pipeline_mode = #tpu.pipeline_mode<synchronous>, transform_indices = @transform_2, window_bounds = array<i64: 1, 392>}, {pipeline_mode = #tpu.pipeline_mode<synchronous>, transform_indices = @transform_3, window_bounds = array<i64: 392, 196>}, {pipeline_mode = #tpu.pipeline_mode<synchronous>, transform_indices = @transform_4, window_bounds = array<i64: 1, 196>}, {pipeline_mode = #tpu.pipeline_mode<synchronous>, transform_indices = @transform_5, window_bounds = array<i64: 196, 98>}, {pipeline_mode = #tpu.pipeline_mode<synchronous>, transform_indices = @transform_6, window_bounds = array<i64: 1, 98>}, {pipeline_mode = #tpu.pipeline_mode<synchronous>, transform_indices = @transform_7, window_bounds = array<i64: 98, 48>}, {pipeline_mode = #tpu.pipeline_mode<synchronous>, transform_indices = @transform_8, window_bounds = array<i64: 1, 48>}, {pipeline_mode = #tpu.pipeline_mode<synchronous>, transform_indices = @transform_9, window_bounds = array<i64: 48, 32>}, {pipeline_mode = #tpu.pipeline_mode<synchronous>, transform_indices = @transform_10, window_bounds = array<i64: 1, 32>}, {pipeline_mode = #tpu.pipeline_mode<synchronous>, transform_indices = @transform_11, window_bounds = array<i64: 32, 128>}, {pipeline_mode = #tpu.pipeline_mode<synchronous>, transform_indices = @transform_12, window_bounds = array<i64: 1, 128>}, {transform_indices = @transform_13, window_bounds = array<i64: 16, 128>}]} {
    %c0 = arith.constant 0 : index
    %c0_0 = arith.constant 0 : index
    %0 = vector.load %arg1[%c0, %c0_0] : memref<16x784xbf16, #tpu.memory_space<vmem>>, vector<16x784xbf16>
    %c0_1 = arith.constant 0 : index
    %c0_2 = arith.constant 0 : index
    %1 = vector.load %arg2[%c0_1, %c0_2] : memref<784x392xbf16, #tpu.memory_space<vmem>>, vector<784x392xbf16>
    %cst = arith.constant dense<0.000000e+00> : vector<16x392xf32>
    %2 = tpu.matmul %0, %1, %cst {dimension_numbers = #tpu.dot_dimension_numbers<[1], [0], [0], [1], [0, 0, 1, 1], [], []>} : vector<16x784xbf16>, vector<784x392xbf16>, vector<16x392xf32> -> vector<16x392xf32>
    %c0_3 = arith.constant 0 : index
    %c0_4 = arith.constant 0 : index
    %3 = vector.load %arg3[%c0_3, %c0_4] : memref<1x392xf32, #tpu.memory_space<vmem>>, vector<1x392xf32>
    %4 = vector.broadcast %3 : vector<1x392xf32> to vector<16x392xf32>
    %5 = arith.addf %2, %4 : vector<16x392xf32>
    %cst_5 = arith.constant 0.000000e+00 : f32
    %6 = vector.broadcast %cst_5 : f32 to vector<16x392xf32>
    %7 = arith.maximumf %5, %6 : vector<16x392xf32>
    %8 = arith.truncf %7 : vector<16x392xf32> to vector<16x392xbf16>
    %c0_6 = arith.constant 0 : index
    %c0_7 = arith.constant 0 : index
    %9 = vector.load %arg4[%c0_6, %c0_7] : memref<392x196xbf16, #tpu.memory_space<vmem>>, vector<392x196xbf16>
    %cst_8 = arith.constant dense<0.000000e+00> : vector<16x196xf32>
    %10 = tpu.matmul %8, %9, %cst_8 {dimension_numbers = #tpu.dot_dimension_numbers<[1], [0], [0], [1], [0, 0, 1, 1], [], []>} : vector<16x392xbf16>, vector<392x196xbf16>, vector<16x196xf32> -> vector<16x196xf32>
    %c0_9 = arith.constant 0 : index
    %c0_10 = arith.constant 0 : index
    %11 = vector.load %arg5[%c0_9, %c0_10] : memref<1x196xf32, #tpu.memory_space<vmem>>, vector<1x196xf32>
    %12 = vector.broadcast %11 : vector<1x196xf32> to vector<16x196xf32>
    %13 = arith.addf %10, %12 : vector<16x196xf32>
    %cst_11 = arith.constant 0.000000e+00 : f32
    %14 = vector.broadcast %cst_11 : f32 to vector<16x196xf32>
    %15 = arith.maximumf %13, %14 : vector<16x196xf32>
    %16 = arith.truncf %15 : vector<16x196xf32> to vector<16x196xbf16>
    %c0_12 = arith.constant 0 : index
    %c0_13 = arith.constant 0 : index
    %17 = vector.load %arg6[%c0_12, %c0_13] : memref<196x98xbf16, #tpu.memory_space<vmem>>, vector<196x98xbf16>
    %cst_14 = arith.constant dense<0.000000e+00> : vector<16x98xf32>
    %18 = tpu.matmul %16, %17, %cst_14 {dimension_numbers = #tpu.dot_dimension_numbers<[1], [0], [0], [1], [0, 0, 1, 1], [], []>} : vector<16x196xbf16>, vector<196x98xbf16>, vector<16x98xf32> -> vector<16x98xf32>
    %c0_15 = arith.constant 0 : index
    %c0_16 = arith.constant 0 : index
    %19 = vector.load %arg7[%c0_15, %c0_16] : memref<1x98xf32, #tpu.memory_space<vmem>>, vector<1x98xf32>
    %20 = vector.broadcast %19 : vector<1x98xf32> to vector<16x98xf32>
    %21 = arith.addf %18, %20 : vector<16x98xf32>
    %cst_17 = arith.constant 0.000000e+00 : f32
    %22 = vector.broadcast %cst_17 : f32 to vector<16x98xf32>
    %23 = arith.maximumf %21, %22 : vector<16x98xf32>
    %24 = arith.truncf %23 : vector<16x98xf32> to vector<16x98xbf16>
    %c0_18 = arith.constant 0 : index
    %c0_19 = arith.constant 0 : index
    %25 = vector.load %arg8[%c0_18, %c0_19] : memref<98x48xbf16, #tpu.memory_space<vmem>>, vector<98x48xbf16>
    %cst_20 = arith.constant dense<0.000000e+00> : vector<16x48xf32>
    %26 = tpu.matmul %24, %25, %cst_20 {dimension_numbers = #tpu.dot_dimension_numbers<[1], [0], [0], [1], [0, 0, 1, 1], [], []>} : vector<16x98xbf16>, vector<98x48xbf16>, vector<16x48xf32> -> vector<16x48xf32>
    %c0_21 = arith.constant 0 : index
    %c0_22 = arith.constant 0 : index
    %27 = vector.load %arg9[%c0_21, %c0_22] : memref<1x48xf32, #tpu.memory_space<vmem>>, vector<1x48xf32>
    %28 = vector.broadcast %27 : vector<1x48xf32> to vector<16x48xf32>
    %29 = arith.addf %26, %28 : vector<16x48xf32>
    %cst_23 = arith.constant 0.000000e+00 : f32
    %30 = vector.broadcast %cst_23 : f32 to vector<16x48xf32>
    %31 = arith.maximumf %29, %30 : vector<16x48xf32>
    %32 = arith.truncf %31 : vector<16x48xf32> to vector<16x48xbf16>
    %c0_24 = arith.constant 0 : index
    %c0_25 = arith.constant 0 : index
    %33 = vector.load %arg10[%c0_24, %c0_25] : memref<48x32xbf16, #tpu.memory_space<vmem>>, vector<48x32xbf16>
    %cst_26 = arith.constant dense<0.000000e+00> : vector<16x32xf32>
    %34 = tpu.matmul %32, %33, %cst_26 {dimension_numbers = #tpu.dot_dimension_numbers<[1], [0], [0], [1], [0, 0, 1, 1], [], []>} : vector<16x48xbf16>, vector<48x32xbf16>, vector<16x32xf32> -> vector<16x32xf32>
    %c0_27 = arith.constant 0 : index
    %c0_28 = arith.constant 0 : index
    %35 = vector.load %arg11[%c0_27, %c0_28] : memref<1x32xf32, #tpu.memory_space<vmem>>, vector<1x32xf32>
    %36 = vector.broadcast %35 : vector<1x32xf32> to vector<16x32xf32>
    %37 = arith.addf %34, %36 : vector<16x32xf32>
    %cst_29 = arith.constant 0.000000e+00 : f32
    %38 = vector.broadcast %cst_29 : f32 to vector<16x32xf32>
    %39 = arith.maximumf %37, %38 : vector<16x32xf32>
    %40 = arith.truncf %39 : vector<16x32xf32> to vector<16x32xbf16>
    %c0_30 = arith.constant 0 : index
    %c0_31 = arith.constant 0 : index
    %41 = vector.load %arg12[%c0_30, %c0_31] : memref<32x128xbf16, #tpu.memory_space<vmem>>, vector<32x128xbf16>
    %cst_32 = arith.constant dense<0.000000e+00> : vector<16x128xf32>
    %42 = tpu.matmul %40, %41, %cst_32 {dimension_numbers = #tpu.dot_dimension_numbers<[1], [0], [0], [1], [0, 0, 1, 1], [], []>} : vector<16x32xbf16>, vector<32x128xbf16>, vector<16x128xf32> -> vector<16x128xf32>
    %c0_33 = arith.constant 0 : index
    %c0_34 = arith.constant 0 : index
    %43 = vector.load %arg13[%c0_33, %c0_34] : memref<1x128xf32, #tpu.memory_space<vmem>>, vector<1x128xf32>
    %44 = vector.broadcast %43 : vector<1x128xf32> to vector<16x128xf32>
    %45 = arith.addf %42, %44 : vector<16x128xf32>
    %c0_35 = arith.constant 0 : index
    %c0_36 = arith.constant 0 : index
    %46 = vector.load %arg14[%c0_35, %c0_36] : memref<16x128xf32, #tpu.memory_space<vmem>>, vector<16x128xf32>
    tpu.vector_store %arg14[%c0_35, %c0_36], %45 {strides = array<i32>} : memref<16x128xf32, #tpu.memory_space<vmem>>, vector<16x128xf32>,
    return
  }
  func.func @transform_0(%arg0: i32) -> (i32, i32) {
    %c0_i32 = arith.constant 0 : i32
    %c0_i32_0 = arith.constant 0 : i32
    return %arg0, %c0_i32 : i32, i32
  }
  func.func @transform_1(%arg0: i32) -> (i32, i32) {
    %c0_i32 = arith.constant 0 : i32
    %c0_i32_0 = arith.constant 0 : i32
    %c0_i32_1 = arith.constant 0 : i32
    return %c0_i32, %c0_i32_0 : i32, i32
  }
  func.func @transform_2(%arg0: i32) -> (i32, i32) {
    %c0_i32 = arith.constant 0 : i32
    %c0_i32_0 = arith.constant 0 : i32
    %c0_i32_1 = arith.constant 0 : i32
    return %c0_i32, %c0_i32_0 : i32, i32
  }
  func.func @transform_3(%arg0: i32) -> (i32, i32) {
    %c0_i32 = arith.constant 0 : i32
    %c0_i32_0 = arith.constant 0 : i32
    %c0_i32_1 = arith.constant 0 : i32
    return %c0_i32, %c0_i32_0 : i32, i32
  }
  func.func @transform_4(%arg0: i32) -> (i32, i32) {
    %c0_i32 = arith.constant 0 : i32
    %c0_i32_0 = arith.constant 0 : i32
    %c0_i32_1 = arith.constant 0 : i32
    return %c0_i32, %c0_i32_0 : i32, i32
  }
  func.func @transform_5(%arg0: i32) -> (i32, i32) {
    %c0_i32 = arith.constant 0 : i32
    %c0_i32_0 = arith.constant 0 : i32
    %c0_i32_1 = arith.constant 0 : i32
    return %c0_i32, %c0_i32_0 : i32, i32
  }
  func.func @transform_6(%arg0: i32) -> (i32, i32) {
    %c0_i32 = arith.constant 0 : i32
    %c0_i32_0 = arith.constant 0 : i32
    %c0_i32_1 = arith.constant 0 : i32
    return %c0_i32, %c0_i32_0 : i32, i32
  }
  func.func @transform_7(%arg0: i32) -> (i32, i32) {
    %c0_i32 = arith.constant 0 : i32
    %c0_i32_0 = arith.constant 0 : i32
    %c0_i32_1 = arith.constant 0 : i32
    return %c0_i32, %c0_i32_0 : i32, i32
  }
  func.func @transform_8(%arg0: i32) -> (i32, i32) {
    %c0_i32 = arith.constant 0 : i32
    %c0_i32_0 = arith.constant 0 : i32
    %c0_i32_1 = arith.constant 0 : i32
    return %c0_i32, %c0_i32_0 : i32, i32
  }
  func.func @transform_9(%arg0: i32) -> (i32, i32) {
    %c0_i32 = arith.constant 0 : i32
    %c0_i32_0 = arith.constant 0 : i32
    %c0_i32_1 = arith.constant 0 : i32
    return %c0_i32, %c0_i32_0 : i32, i32
  }
  func.func @transform_10(%arg0: i32) -> (i32, i32) {
    %c0_i32 = arith.constant 0 : i32
    %c0_i32_0 = arith.constant 0 : i32
    %c0_i32_1 = arith.constant 0 : i32
    return %c0_i32, %c0_i32_0 : i32, i32
  }
  func.func @transform_11(%arg0: i32) -> (i32, i32) {
    %c0_i32 = arith.constant 0 : i32
    %c0_i32_0 = arith.constant 0 : i32
    %c0_i32_1 = arith.constant 0 : i32
    return %c0_i32, %c0_i32_0 : i32, i32
  }
  func.func @transform_12(%arg0: i32) -> (i32, i32) {
    %c0_i32 = arith.constant 0 : i32
    %c0_i32_0 = arith.constant 0 : i32
    %c0_i32_1 = arith.constant 0 : i32
    return %c0_i32, %c0_i32_0 : i32, i32
  }
  func.func @transform_13(%arg0: i32) -> (i32, i32) {
    %c0_i32 = arith.constant 0 : i32
    %c0_i32_0 = arith.constant 0 : i32
    return %arg0, %c0_i32 : i32, i32
  }
}

</mosaic_0001>

<llo_original>
// kernel: tpu_custom_call.1
$region0: #{tpu_custom_call.1}
  #allocation0 [shape = 'u32[]', space=smem, size = 0x4, offset = 0x4, fixed_abs, tag = 'smem constant byte address 0x4 - core index']
  #allocation1 [shape = 'u32[144,128]{1,0:T(1,128)}', space=vmem, size = 0x12000, scoped, tag = 'internal scratch']
  %s0 = inlined_call_operand.vmem [shape: bf16[32,784], index: 0, kind: input, shape index: {}]
  %s1 = inlined_call_operand.vmem [shape: bf16[784,392], index: 1, kind: input, shape index: {}]
  %s2 = inlined_call_operand.vmem [shape: f32[1,392], index: 2, kind: input, shape index: {}]
  %s3 = inlined_call_operand.vmem [shape: bf16[392,196], index: 3, kind: input, shape index: {}]
  %s4 = inlined_call_operand.vmem [shape: f32[1,196], index: 4, kind: input, shape index: {}]
  %s5 = inlined_call_operand.vmem [shape: bf16[196,98], index: 5, kind: input, shape index: {}]
  %s6 = inlined_call_operand.vmem [shape: f32[1,98], index: 6, kind: input, shape index: {}]
  %s7 = inlined_call_operand.vmem [shape: bf16[98,48], index: 7, kind: input, shape index: {}]
  %s8 = inlined_call_operand.vmem [shape: f32[1,48], index: 8, kind: input, shape index: {}]
  %s9 = inlined_call_operand.vmem [shape: bf16[48,32], index: 9, kind: input, shape index: {}]
  %s10 = inlined_call_operand.vmem [shape: f32[1,32], index: 10, kind: input, shape index: {}]
  %s11 = inlined_call_operand.vmem [shape: bf16[32,128], index: 11, kind: input, shape index: {}]
  %s12 = inlined_call_operand.vmem [shape: f32[1,128], index: 12, kind: input, shape index: {}]
  %s13 = inlined_call_operand.hbm [shape: f32[32,128], index: 13, kind: output, shape index: {}]
  %s14 = sld [smem:[#allocation0]]
  $region85: #{tpu_custom_call.1} parent=0
    _
  %s16 = ssub.s32 1, %s14
  %s17 = scalar_select 0, %s16, %s14
  $region1: #{tpu_custom_call.1} parent=0
    #allocation2 [shape = 'u8[16384]{0}', space=vmem, size = 0x4000, scoped, tag = 'output window, operand 0']
    #allocation3 [shape = 's32[2]{0}', space=sflag, size = 0x8, scoped, tag = 'scoped memory for tpu_custom_call.1']
    %18 = vsyncpa [#allocation3], 0
    %s19 = scalar_lea.sflag [#allocation3], 1
    %20 = vsyncpa %s19, 0
    loop: start=0, step=1, limit=4
    $region2: #{tpu_custom_call.1} parent=1 // loop_pre_header
      _
    $region3: #{tpu_custom_call.1} parent=1 // loop_header
      %s22 = sphi 0, %s26
      %p23 = scmp.ge.s32.totalorder %s22, 4
      %s32 = sphi 0, %s34
      %s35 = sphi 0, %s32
      %s36 = sphi 0, %s35
      %s52 = sphi 0, %s36
      %s56 = sphi 0, %s56
      %s58 = sphi 0, %s56
      %s59 = sphi 0, %s58
      %s73 = sphi 0, %s59
      %s77 = sphi 0, %s77
      %s79 = sphi 0, %s77
      %s80 = sphi 0, %s79
      %s94 = sphi 0, %s80
      %s98 = sphi 0, %s98
      %s100 = sphi 0, %s98
      %s101 = sphi 0, %s100
      %s115 = sphi 0, %s101
      %s119 = sphi 0, %s119
      %s121 = sphi 0, %s119
      %s122 = sphi 0, %s121
      %s136 = sphi 0, %s122
      %s140 = sphi 0, %s140
      %s142 = sphi 0, %s140
      %s143 = sphi 0, %s142
      %s157 = sphi 0, %s143
      %s161 = sphi 0, %s161
      %s163 = sphi 0, %s161
      %s164 = sphi 0, %s163
      %s178 = sphi 0, %s164
      %s182 = sphi 0, %s182
      %s184 = sphi 0, %s182
      %s185 = sphi 0, %s184
      %s199 = sphi 0, %s185
      %s203 = sphi 0, %s203
      %s205 = sphi 0, %s203
      %s206 = sphi 0, %s205
      %s220 = sphi 0, %s206
      %s224 = sphi 0, %s224
      %s226 = sphi 0, %s224
      %s227 = sphi 0, %s226
      %s241 = sphi 0, %s227
      %s245 = sphi 0, %s245
      %s247 = sphi 0, %s245
      %s248 = sphi 0, %s247
      %s262 = sphi 0, %s248
      %s266 = sphi 0, %s266
      %s268 = sphi 0, %s266
      %s269 = sphi 0, %s268
      %s283 = sphi 0, %s269
      %s287 = sphi 0, %s287
      %s289 = sphi 0, %s287
      %s290 = sphi 0, %s289
      %s304 = sphi 0, %s290
      %s310 = sphi 0, %s312
      %s313 = sphi 0, %s310
      %s314 = sphi 0, %s313
      %s330 = sphi 0, %s314
    $region4: #{tpu_custom_call.1} parent=1 // loop_header_branch
      %25 = sbr.rel (%p23) target = $region8
    $region5: #{tpu_custom_call.1} parent=1 // loop_body
      %s27 = ssub.s32 %s22, 1
      %s28 = ssub.s32 %s22, 2
      %s29 = sadd.s32 %s22, 1
      %s30 = ssub.s32 %s22, %s29
      %p31 = scmp.eq.s32.totalorder %s30, 0
      %s33 = sadd.s32 %s32, 1
      %s34 = scalar_select %p31, %s32, %s33
      %p37 = pneg %p31
      %p38 = scmp.eq.s32.totalorder %s22, 1
      %p39 = por %p37, %p38
      %p40 = scmp.ne.s32.totalorder %s32, %s35
      %p41 = scmp.eq.s32.totalorder %s22, 0
      %p42 = por %p40, %p41
      %p43 = scmp.ne.s32.totalorder %s32, %s35
      %p44 = scmp.eq.s32.totalorder %s27, 1
      %p45 = por %p43, %p44
      %p46 = scmp.ne.s32.totalorder %s35, %s36
      %p47 = scmp.eq.s32.totalorder %s27, 0
      %p48 = por %p46, %p47
      %p49 = scmp.ne.s32.totalorder %s35, %s36
      %p50 = scmp.eq.s32.totalorder %s28, 1
      %p51 = por %p49, %p50
      %p53 = scmp.ne.s32.totalorder %s36, %s52
      %p54 = scmp.eq.s32.totalorder %s28, 0
      %p55 = por %p53, %p54
      %s57 = sadd.s32 %s56, 1
      %p60 = scmp.eq.s32.totalorder %s22, 1
      %p61 = scmp.ne.s32.totalorder %s56, %s58
      %p62 = scmp.eq.s32.totalorder %s22, 0
      %p63 = por %p61, %p62
      %p64 = scmp.ne.s32.totalorder %s56, %s58
      %p65 = scmp.eq.s32.totalorder %s27, 1
      %p66 = por %p64, %p65
      %p67 = scmp.ne.s32.totalorder %s58, %s59
      %p68 = scmp.eq.s32.totalorder %s27, 0
      %p69 = por %p67, %p68
      %p70 = scmp.ne.s32.totalorder %s58, %s59
      %p71 = scmp.eq.s32.totalorder %s28, 1
      %p72 = por %p70, %p71
      %p74 = scmp.ne.s32.totalorder %s59, %s73
      %p75 = scmp.eq.s32.totalorder %s28, 0
      %p76 = por %p74, %p75
      %s78 = sadd.s32 %s77, 1
      %p81 = scmp.eq.s32.totalorder %s22, 1
      %p82 = scmp.ne.s32.totalorder %s77, %s79
      %p83 = scmp.eq.s32.totalorder %s22, 0
      %p84 = por %p82, %p83
      %p85 = scmp.ne.s32.totalorder %s77, %s79
      %p86 = scmp.eq.s32.totalorder %s27, 1
      %p87 = por %p85, %p86
      %p88 = scmp.ne.s32.totalorder %s79, %s80
      %p89 = scmp.eq.s32.totalorder %s27, 0
      %p90 = por %p88, %p89
      %p91 = scmp.ne.s32.totalorder %s79, %s80
      %p92 = scmp.eq.s32.totalorder %s28, 1
      %p93 = por %p91, %p92
      %p95 = scmp.ne.s32.totalorder %s80, %s94
      %p96 = scmp.eq.s32.totalorder %s28, 0
      %p97 = por %p95, %p96
      %s99 = sadd.s32 %s98, 1
      %p102 = scmp.eq.s32.totalorder %s22, 1
      %p103 = scmp.ne.s32.totalorder %s98, %s100
      %p104 = scmp.eq.s32.totalorder %s22, 0
      %p105 = por %p103, %p104
      %p106 = scmp.ne.s32.totalorder %s98, %s100
      %p107 = scmp.eq.s32.totalorder %s27, 1
      %p108 = por %p106, %p107
      %p109 = scmp.ne.s32.totalorder %s100, %s101
      %p110 = scmp.eq.s32.totalorder %s27, 0
      %p111 = por %p109, %p110
      %p112 = scmp.ne.s32.totalorder %s100, %s101
      %p113 = scmp.eq.s32.totalorder %s28, 1
      %p114 = por %p112, %p113
      %p116 = scmp.ne.s32.totalorder %s101, %s115
      %p117 = scmp.eq.s32.totalorder %s28, 0
      %p118 = por %p116, %p117
      %s120 = sadd.s32 %s119, 1
      %p123 = scmp.eq.s32.totalorder %s22, 1
      %p124 = scmp.ne.s32.totalorder %s119, %s121
      %p125 = scmp.eq.s32.totalorder %s22, 0
      %p126 = por %p124, %p125
      %p127 = scmp.ne.s32.totalorder %s119, %s121
      %p128 = scmp.eq.s32.totalorder %s27, 1
      %p129 = por %p127, %p128
      %p130 = scmp.ne.s32.totalorder %s121, %s122
      %p131 = scmp.eq.s32.totalorder %s27, 0
      %p132 = por %p130, %p131
      %p133 = scmp.ne.s32.totalorder %s121, %s122
      %p134 = scmp.eq.s32.totalorder %s28, 1
      %p135 = por %p133, %p134
      %p137 = scmp.ne.s32.totalorder %s122, %s136
      %p138 = scmp.eq.s32.totalorder %s28, 0
      %p139 = por %p137, %p138
      %s141 = sadd.s32 %s140, 1
      %p144 = scmp.eq.s32.totalorder %s22, 1
      %p145 = scmp.ne.s32.totalorder %s140, %s142
      %p146 = scmp.eq.s32.totalorder %s22, 0
      %p147 = por %p145, %p146
      %p148 = scmp.ne.s32.totalorder %s140, %s142
      %p149 = scmp.eq.s32.totalorder %s27, 1
      %p150 = por %p148, %p149
      %p151 = scmp.ne.s32.totalorder %s142, %s143
      %p152 = scmp.eq.s32.totalorder %s27, 0
      %p153 = por %p151, %p152
      %p154 = scmp.ne.s32.totalorder %s142, %s143
      %p155 = scmp.eq.s32.totalorder %s28, 1
      %p156 = por %p154, %p155
      %p158 = scmp.ne.s32.totalorder %s143, %s157
      %p159 = scmp.eq.s32.totalorder %s28, 0
      %p160 = por %p158, %p159
      %s162 = sadd.s32 %s161, 1
      %p165 = scmp.eq.s32.totalorder %s22, 1
      %p166 = scmp.ne.s32.totalorder %s161, %s163
      %p167 = scmp.eq.s32.totalorder %s22, 0
      %p168 = por %p166, %p167
      %p169 = scmp.ne.s32.totalorder %s161, %s163
      %p170 = scmp.eq.s32.totalorder %s27, 1
      %p171 = por %p169, %p170
      %p172 = scmp.ne.s32.totalorder %s163, %s164
      %p173 = scmp.eq.s32.totalorder %s27, 0
      %p174 = por %p172, %p173
      %p175 = scmp.ne.s32.totalorder %s163, %s164
      %p176 = scmp.eq.s32.totalorder %s28, 1
      %p177 = por %p175, %p176
      %p179 = scmp.ne.s32.totalorder %s164, %s178
      %p180 = scmp.eq.s32.totalorder %s28, 0
      %p181 = por %p179, %p180
      %s183 = sadd.s32 %s182, 1
      %p186 = scmp.eq.s32.totalorder %s22, 1
      %p187 = scmp.ne.s32.totalorder %s182, %s184
      %p188 = scmp.eq.s32.totalorder %s22, 0
      %p189 = por %p187, %p188
      %p190 = scmp.ne.s32.totalorder %s182, %s184
      %p191 = scmp.eq.s32.totalorder %s27, 1
      %p192 = por %p190, %p191
      %p193 = scmp.ne.s32.totalorder %s184, %s185
      %p194 = scmp.eq.s32.totalorder %s27, 0
      %p195 = por %p193, %p194
      %p196 = scmp.ne.s32.totalorder %s184, %s185
      %p197 = scmp.eq.s32.totalorder %s28, 1
      %p198 = por %p196, %p197
      %p200 = scmp.ne.s32.totalorder %s185, %s199
      %p201 = scmp.eq.s32.totalorder %s28, 0
      %p202 = por %p200, %p201
      %s204 = sadd.s32 %s203, 1
      %p207 = scmp.eq.s32.totalorder %s22, 1
      %p208 = scmp.ne.s32.totalorder %s203, %s205
      %p209 = scmp.eq.s32.totalorder %s22, 0
      %p210 = por %p208, %p209
      %p211 = scmp.ne.s32.totalorder %s203, %s205
      %p212 = scmp.eq.s32.totalorder %s27, 1
      %p213 = por %p211, %p212
      %p214 = scmp.ne.s32.totalorder %s205, %s206
      %p215 = scmp.eq.s32.totalorder %s27, 0
      %p216 = por %p214, %p215
      %p217 = scmp.ne.s32.totalorder %s205, %s206
      %p218 = scmp.eq.s32.totalorder %s28, 1
      %p219 = por %p217, %p218
      %p221 = scmp.ne.s32.totalorder %s206, %s220
      %p222 = scmp.eq.s32.totalorder %s28, 0
      %p223 = por %p221, %p222
      %s225 = sadd.s32 %s224, 1
      %p228 = scmp.eq.s32.totalorder %s22, 1
      %p229 = scmp.ne.s32.totalorder %s224, %s226
      %p230 = scmp.eq.s32.totalorder %s22, 0
      %p231 = por %p229, %p230
      %p232 = scmp.ne.s32.totalorder %s224, %s226
      %p233 = scmp.eq.s32.totalorder %s27, 1
      %p234 = por %p232, %p233
      %p235 = scmp.ne.s32.totalorder %s226, %s227
      %p236 = scmp.eq.s32.totalorder %s27, 0
      %p237 = por %p235, %p236
      %p238 = scmp.ne.s32.totalorder %s226, %s227
      %p239 = scmp.eq.s32.totalorder %s28, 1
      %p240 = por %p238, %p239
      %p242 = scmp.ne.s32.totalorder %s227, %s241
      %p243 = scmp.eq.s32.totalorder %s28, 0
      %p244 = por %p242, %p243
      %s246 = sadd.s32 %s245, 1
      %p249 = scmp.eq.s32.totalorder %s22, 1
      %p250 = scmp.ne.s32.totalorder %s245, %s247
      %p251 = scmp.eq.s32.totalorder %s22, 0
      %p252 = por %p250, %p251
      %p253 = scmp.ne.s32.totalorder %s245, %s247
      %p254 = scmp.eq.s32.totalorder %s27, 1
      %p255 = por %p253, %p254
      %p256 = scmp.ne.s32.totalorder %s247, %s248
      %p257 = scmp.eq.s32.totalorder %s27, 0
      %p258 = por %p256, %p257
      %p259 = scmp.ne.s32.totalorder %s247, %s248
      %p260 = scmp.eq.s32.totalorder %s28, 1
      %p261 = por %p259, %p260
      %p263 = scmp.ne.s32.totalorder %s248, %s262
      %p264 = scmp.eq.s32.totalorder %s28, 0
      %p265 = por %p263, %p264
      %s267 = sadd.s32 %s266, 1
      %p270 = scmp.eq.s32.totalorder %s22, 1
      %p271 = scmp.ne.s32.totalorder %s266, %s268
      %p272 = scmp.eq.s32.totalorder %s22, 0
      %p273 = por %p271, %p272
      %p274 = scmp.ne.s32.totalorder %s266, %s268
      %p275 = scmp.eq.s32.totalorder %s27, 1
      %p276 = por %p274, %p275
      %p277 = scmp.ne.s32.totalorder %s268, %s269
      %p278 = scmp.eq.s32.totalorder %s27, 0
      %p279 = por %p277, %p278
      %p280 = scmp.ne.s32.totalorder %s268, %s269
      %p281 = scmp.eq.s32.totalorder %s28, 1
      %p282 = por %p280, %p281
      %p284 = scmp.ne.s32.totalorder %s269, %s283
      %p285 = scmp.eq.s32.totalorder %s28, 0
      %p286 = por %p284, %p285
      %s288 = sadd.s32 %s287, 1
      %p291 = scmp.eq.s32.totalorder %s22, 1
      %p292 = scmp.ne.s32.totalorder %s287, %s289
      %p293 = scmp.eq.s32.totalorder %s22, 0
      %p294 = por %p292, %p293
      %p295 = scmp.ne.s32.totalorder %s287, %s289
      %p296 = scmp.eq.s32.totalorder %s27, 1
      %p297 = por %p295, %p296
      %p298 = scmp.ne.s32.totalorder %s289, %s290
      %p299 = scmp.eq.s32.totalorder %s27, 0
      %p300 = por %p298, %p299
      %p301 = scmp.ne.s32.totalorder %s289, %s290
      %p302 = scmp.eq.s32.totalorder %s28, 1
      %p303 = por %p301, %p302
      %p305 = scmp.ne.s32.totalorder %s290, %s304
      %p306 = scmp.eq.s32.totalorder %s28, 0
      %p307 = por %p305, %p306
      %s308 = ssub.s32 %s22, %s29
      %p309 = scmp.eq.s32.totalorder %s308, 0
      %s311 = sadd.s32 %s310, 1
      %s312 = scalar_select %p309, %s310, %s311
      %p315 = pneg %p309
      %p316 = scmp.eq.s32.totalorder %s22, 1
      %p317 = por %p315, %p316
      %p318 = scmp.ne.s32.totalorder %s310, %s313
      %p319 = scmp.eq.s32.totalorder %s22, 0
      %p320 = por %p318, %p319
      %p321 = scmp.ne.s32.totalorder %s310, %s313
      %p322 = scmp.eq.s32.totalorder %s27, 1
      %p323 = por %p321, %p322
      %p324 = scmp.ne.s32.totalorder %s313, %s314
      %p325 = scmp.eq.s32.totalorder %s27, 0
      %p326 = por %p324, %p325
      %p327 = scmp.ne.s32.totalorder %s313, %s314
      %p328 = scmp.eq.s32.totalorder %s28, 1
      %p329 = por %p327, %p328
      %p331 = scmp.ne.s32.totalorder %s314, %s330
      %p332 = scmp.eq.s32.totalorder %s28, 0
      %p333 = por %p331, %p332
      %p334 = scmp.le.s32.totalorder 1, %s22
      %p335 = scmp.lt.s32.totalorder %s22, 3
      %p336 = pnand %p334, %p335
      %p337 = pneg %p336
      // Predicated region
      $region9: #{tpu_custom_call.1} parent=5 // pred_check
        _
      $region10: #{tpu_custom_call.1} parent=5 // pred_check_branch
        %339 = sbr.rel (%p336) target = $region12
      $region11: #{tpu_custom_call.1} parent=5 // pred_region
        %s340 = ssub.s32 %s22, 1
        // Predicated region
        $region13: #{tpu_custom_call.1} parent=11 // pred_check
          %p341 = pneg %p69
        $region14: #{tpu_custom_call.1} parent=11 // pred_check_branch
          %343 = sbr.rel (%p341) target = $region16
        $region15: #{tpu_custom_call.1} parent=11 // pred_region
          _
        $region16: #{tpu_custom_call.1} parent=11 // pred_fallthru
          _
        // Predicated region
        $region17: #{tpu_custom_call.1} parent=11 // pred_check
          %p344 = pneg %p90
        $region18: #{tpu_custom_call.1} parent=11 // pred_check_branch
          %346 = sbr.rel (%p344) target = $region20
        $region19: #{tpu_custom_call.1} parent=11 // pred_region
          _
        $region20: #{tpu_custom_call.1} parent=11 // pred_fallthru
          _
        // Predicated region
        $region21: #{tpu_custom_call.1} parent=11 // pred_check
          %p347 = pneg %p111
        $region22: #{tpu_custom_call.1} parent=11 // pred_check_branch
          %349 = sbr.rel (%p347) target = $region24
        $region23: #{tpu_custom_call.1} parent=11 // pred_region
          _
        $region24: #{tpu_custom_call.1} parent=11 // pred_fallthru
          _
        // Predicated region
        $region25: #{tpu_custom_call.1} parent=11 // pred_check
          %p350 = pneg %p132
        $region26: #{tpu_custom_call.1} parent=11 // pred_check_branch
          %352 = sbr.rel (%p350) target = $region28
        $region27: #{tpu_custom_call.1} parent=11 // pred_region
          _
        $region28: #{tpu_custom_call.1} parent=11 // pred_fallthru
          _
        // Predicated region
        $region29: #{tpu_custom_call.1} parent=11 // pred_check
          %p353 = pneg %p153
        $region30: #{tpu_custom_call.1} parent=11 // pred_check_branch
          %355 = sbr.rel (%p353) target = $region32
        $region31: #{tpu_custom_call.1} parent=11 // pred_region
          _
        $region32: #{tpu_custom_call.1} parent=11 // pred_fallthru
          _
        // Predicated region
        $region33: #{tpu_custom_call.1} parent=11 // pred_check
          %p356 = pneg %p174
        $region34: #{tpu_custom_call.1} parent=11 // pred_check_branch
          %358 = sbr.rel (%p356) target = $region36
        $region35: #{tpu_custom_call.1} parent=11 // pred_region
          _
        $region36: #{tpu_custom_call.1} parent=11 // pred_fallthru
          _
        // Predicated region
        $region37: #{tpu_custom_call.1} parent=11 // pred_check
          %p359 = pneg %p195
        $region38: #{tpu_custom_call.1} parent=11 // pred_check_branch
          %361 = sbr.rel (%p359) target = $region40
        $region39: #{tpu_custom_call.1} parent=11 // pred_region
          _
        $region40: #{tpu_custom_call.1} parent=11 // pred_fallthru
          _
        // Predicated region
        $region41: #{tpu_custom_call.1} parent=11 // pred_check
          %p362 = pneg %p216
        $region42: #{tpu_custom_call.1} parent=11 // pred_check_branch
          %364 = sbr.rel (%p362) target = $region44
        $region43: #{tpu_custom_call.1} parent=11 // pred_region
          _
        $region44: #{tpu_custom_call.1} parent=11 // pred_fallthru
          _
        // Predicated region
        $region45: #{tpu_custom_call.1} parent=11 // pred_check
          %p365 = pneg %p237
        $region46: #{tpu_custom_call.1} parent=11 // pred_check_branch
          %367 = sbr.rel (%p365) target = $region48
        $region47: #{tpu_custom_call.1} parent=11 // pred_region
          _
        $region48: #{tpu_custom_call.1} parent=11 // pred_fallthru
          _
        // Predicated region
        $region49: #{tpu_custom_call.1} parent=11 // pred_check
          %p368 = pneg %p258
        $region50: #{tpu_custom_call.1} parent=11 // pred_check_branch
          %370 = sbr.rel (%p368) target = $region52
        $region51: #{tpu_custom_call.1} parent=11 // pred_region
          _
        $region52: #{tpu_custom_call.1} parent=11 // pred_fallthru
          _
        // Predicated region
        $region53: #{tpu_custom_call.1} parent=11 // pred_check
          %p371 = pneg %p279
        $region54: #{tpu_custom_call.1} parent=11 // pred_check_branch
          %373 = sbr.rel (%p371) target = $region56
        $region55: #{tpu_custom_call.1} parent=11 // pred_region
          _
        $region56: #{tpu_custom_call.1} parent=11 // pred_fallthru
          _
        // Predicated region
        $region57: #{tpu_custom_call.1} parent=11 // pred_check
          %p374 = pneg %p300
        $region58: #{tpu_custom_call.1} parent=11 // pred_check_branch
          %376 = sbr.rel (%p374) target = $region60
        $region59: #{tpu_custom_call.1} parent=11 // pred_region
          _
        $region60: #{tpu_custom_call.1} parent=11 // pred_fallthru
          _
      $region12: #{tpu_custom_call.1} parent=5 // pred_fallthru
        _
      %p377 = scmp.lt.s32.totalorder %s22, 2
      // Predicated region
      $region61: #{tpu_custom_call.1} parent=5 // pred_check
        %p378 = pneg %p377
      $region62: #{tpu_custom_call.1} parent=5 // pred_check_branch
        %380 = sbr.rel (%p378) target = $region64
      $region63: #{tpu_custom_call.1} parent=5 // pred_region
        // Predicated region
        $region65: #{tpu_custom_call.1} parent=63 // pred_check
          %p381 = pneg %p42
        $region66: #{tpu_custom_call.1} parent=63 // pred_check_branch
          %383 = sbr.rel (%p381) target = $region68
        $region67: #{tpu_custom_call.1} parent=63 // pred_region
          %s384 = smul.u32 2, %s22
          %p385 = scmp.lt.s32.totalorder %s384, 3
          %s386 = scalar_select %p385, %s384, 3
          %s387 = smul.addr %s386, 7
          %s388 = smul.addr %s387, 4
          %s389 = scalar_lea.vmem %s0, %s388
          %s390 = smul.u32 2, %s22
        $region68: #{tpu_custom_call.1} parent=63 // pred_fallthru
          _
      $region64: #{tpu_custom_call.1} parent=5 // pred_fallthru
        _
      %p391 = scmp.le.s32.totalorder 1, %s22
      %p392 = scmp.lt.s32.totalorder %s22, 3
      %p393 = pnand %p391, %p392
      %p394 = pneg %p393
      // Predicated region
      $region69: #{tpu_custom_call.1} parent=5 // pred_check
        _
      $region70: #{tpu_custom_call.1} parent=5 // pred_check_branch
        %396 = sbr.rel (%p393) target = $region72
      $region71: #{tpu_custom_call.1} parent=5 // pred_region
        %s397 = ssub.s32 %s22, 1
        %s398 = smul.u32 2, %s27
        %p399 = scmp.lt.s32.totalorder %s398, 3
        %s400 = scalar_select %p399, %s398, 3
        %s401 = smul.addr %s400, 7
        %s402 = smul.addr %s401, 4
        %s403 = scalar_lea.vmem %s0, %s402
        %p404 = pneg %p48
        %p405 = pneg %p45
        %p406 = pneg %p69
        %p407 = pneg %p66
        %p408 = pneg %p90
        %p409 = pneg %p87
        %p410 = pneg %p111
        %p411 = pneg %p108
        %p412 = pneg %p132
        %p413 = pneg %p129
        %p414 = pneg %p153
        %p415 = pneg %p150
        %p416 = pneg %p174
        %p417 = pneg %p171
        %p418 = pneg %p195
        %p419 = pneg %p192
        %p420 = pneg %p216
        %p421 = pneg %p213
        %p422 = pneg %p237
        %p423 = pneg %p234
        %p424 = pneg %p258
        %p425 = pneg %p255
        %p426 = pneg %p279
        %p427 = pneg %p276
        %p428 = pneg %p300
        %p429 = pneg %p297
        %p430 = pneg %p326
        %p431 = pneg %p323
        %s432 = sand.u32 %s313, 1
        %s433 = scalar_lea.sflag [#allocation3], %s432
        %s434 = sand.u32 %s313, 1
        %s435 = smul.addr %s434, 16
        %s436 = scalar_lea.vmem [#allocation2], %s435
        %s437 = smul.u32 2, %s27
        %p438 = scmp.lt.s32.totalorder %s437, 3
        %s439 = scalar_select %p438, %s437, 3
        %s440 = smul.addr %s439, 7
        %s441 = smul.addr %s440, 4
        %s442 = scalar_lea.vmem %s0, %s441
        %s443 = smul.u32 2, %s27
        %s444 = smul.u32 2, %s27
        %v446 = vld [vmem:[%s442] sm:$0xff]
        %v447 = vld [vmem:[%s442 + $0x8] sm:$0xff]
        %v448 = vld [vmem:[%s442 + $0x10] sm:$0xff]
        %v449 = vld [vmem:[%s442 + $0x18] sm:$0xf]
        %v450 = vld [vmem:[%s442 + $0x1c] sm:$0xff]
        %v451 = vld [vmem:[%s442 + $0x24] sm:$0xff]
        %v452 = vld [vmem:[%s442 + $0x2c] sm:$0xff]
        %v453 = vld [vmem:[%s442 + $0x34] sm:$0xf]
        %v454 = vld [vmem:[%s1] sm:$0xff]
        %v455 = vld [vmem:[%s1 + $0x8] sm:$0xff]
        %v456 = vld [vmem:[%s1 + $0x10] sm:$0xff]
        %v457 = vld [vmem:[%s1 + $0x18] sm:$0xff]
        %v458 = vld [vmem:[%s1 + $0x20] sm:$0xff]
        %v459 = vld [vmem:[%s1 + $0x28] sm:$0xff]
        %v460 = vld [vmem:[%s1 + $0x30] sm:$0xff]
        %v461 = vld [vmem:[%s1 + $0x38] sm:$0xff]
        %v462 = vld [vmem:[%s1 + $0x40] sm:$0xff]
        %v463 = vld [vmem:[%s1 + $0x48] sm:$0xff]
        %v464 = vld [vmem:[%s1 + $0x50] sm:$0xff]
        %v465 = vld [vmem:[%s1 + $0x58] sm:$0xff]
        %v466 = vld [vmem:[%s1 + $0x60] sm:$0xff]
        %v467 = vld [vmem:[%s1 + $0x68] sm:$0xff]
        %v468 = vld [vmem:[%s1 + $0x70] sm:$0xff]
        %v469 = vld [vmem:[%s1 + $0x78] sm:$0xff]
        %v470 = vld [vmem:[%s1 + $0x80] sm:$0xff]
        %v471 = vld [vmem:[%s1 + $0x88] sm:$0xff]
        %v472 = vld [vmem:[%s1 + $0x90] sm:$0xff]
        %v473 = vld [vmem:[%s1 + $0x98] sm:$0xff]
        %v474 = vld [vmem:[%s1 + $0xa0] sm:$0xff]
        %v475 = vld [vmem:[%s1 + $0xa8] sm:$0xff]
        %v476 = vld [vmem:[%s1 + $0xb0] sm:$0xff]
        %v477 = vld [vmem:[%s1 + $0xb8] sm:$0xff]
        %v478 = vld [vmem:[%s1 + $0xc0] sm:$0xff]
        %v479 = vld [vmem:[%s1 + $0xc8] sm:$0xff]
        %v480 = vld [vmem:[%s1 + $0xd0] sm:$0xff]
        %v481 = vld [vmem:[%s1 + $0xd8] sm:$0xff]
        %v482 = vld [vmem:[%s1 + $0xe0] sm:$0xff]
        %v483 = vld [vmem:[%s1 + $0xe8] sm:$0xff]
        %v484 = vld [vmem:[%s1 + $0xf0] sm:$0xff]
        %v485 = vld [vmem:[%s1 + $0xf8] sm:$0xff]
        %v486 = vld [vmem:[%s1 + $0x100] sm:$0xff]
        %v487 = vld [vmem:[%s1 + $0x108] sm:$0xff]
        %v488 = vld [vmem:[%s1 + $0x110] sm:$0xff]
        %v489 = vld [vmem:[%s1 + $0x118] sm:$0xff]
        %v490 = vld [vmem:[%s1 + $0x120] sm:$0xff]
        %v491 = vld [vmem:[%s1 + $0x128] sm:$0xff]
        %v492 = vld [vmem:[%s1 + $0x130] sm:$0xff]
        %v493 = vld [vmem:[%s1 + $0x138] sm:$0xff]
        %v494 = vld [vmem:[%s1 + $0x140] sm:$0xff]
        %v495 = vld [vmem:[%s1 + $0x148] sm:$0xff]
        %v496 = vld [vmem:[%s1 + $0x150] sm:$0xff]
        %v497 = vld [vmem:[%s1 + $0x158] sm:$0xff]
        %v498 = vld [vmem:[%s1 + $0x160] sm:$0xff]
        %v499 = vld [vmem:[%s1 + $0x168] sm:$0xff]
        %v500 = vld [vmem:[%s1 + $0x170] sm:$0xff]
        %v501 = vld [vmem:[%s1 + $0x178] sm:$0xff]
        %v502 = vld [vmem:[%s1 + $0x180] sm:$0xff]
        %v503 = vld [vmem:[%s1 + $0x188] sm:$0xff]
        %v504 = vld [vmem:[%s1 + $0x190] sm:$0xff]
        %v505 = vld [vmem:[%s1 + $0x198] sm:$0xff]
        %v506 = vld [vmem:[%s1 + $0x1a0] sm:$0xff]
        %v507 = vld [vmem:[%s1 + $0x1a8] sm:$0xff]
        %v508 = vld [vmem:[%s1 + $0x1b0] sm:$0xff]
        %v509 = vld [vmem:[%s1 + $0x1b8] sm:$0xff]
        %v510 = vld [vmem:[%s1 + $0x1c0] sm:$0xff]
        %v511 = vld [vmem:[%s1 + $0x1c8] sm:$0xff]
        %v512 = vld [vmem:[%s1 + $0x1d0] sm:$0xff]
        %v513 = vld [vmem:[%s1 + $0x1d8] sm:$0xff]
        %v514 = vld [vmem:[%s1 + $0x1e0] sm:$0xff]
        %v515 = vld [vmem:[%s1 + $0x1e8] sm:$0xff]
        %v516 = vld [vmem:[%s1 + $0x1f0] sm:$0xff]
        %v517 = vld [vmem:[%s1 + $0x1f8] sm:$0xff]
        %v518 = vld [vmem:[%s1 + $0x200] sm:$0xff]
        %v519 = vld [vmem:[%s1 + $0x208] sm:$0xff]
        %v520 = vld [vmem:[%s1 + $0x210] sm:$0xff]
        %v521 = vld [vmem:[%s1 + $0x218] sm:$0xff]
        %v522 = vld [vmem:[%s1 + $0x220] sm:$0xff]
        %v523 = vld [vmem:[%s1 + $0x228] sm:$0xff]
        %v524 = vld [vmem:[%s1 + $0x230] sm:$0xff]
        %v525 = vld [vmem:[%s1 + $0x238] sm:$0xff]
        %v526 = vld [vmem:[%s1 + $0x240] sm:$0xff]
        %v527 = vld [vmem:[%s1 + $0x248] sm:$0xff]
        %v528 = vld [vmem:[%s1 + $0x250] sm:$0xff]
        %v529 = vld [vmem:[%s1 + $0x258] sm:$0xff]
        %v530 = vld [vmem:[%s1 + $0x260] sm:$0xff]
        %v531 = vld [vmem:[%s1 + $0x268] sm:$0xff]
        %v532 = vld [vmem:[%s1 + $0x270] sm:$0xff]
        %v533 = vld [vmem:[%s1 + $0x278] sm:$0xff]
        %v534 = vld [vmem:[%s1 + $0x280] sm:$0xff]
        %v535 = vld [vmem:[%s1 + $0x288] sm:$0xff]
        %v536 = vld [vmem:[%s1 + $0x290] sm:$0xff]
        %v537 = vld [vmem:[%s1 + $0x298] sm:$0xff]
        %v538 = vld [vmem:[%s1 + $0x2a0] sm:$0xff]
        %v539 = vld [vmem:[%s1 + $0x2a8] sm:$0xff]
        %v540 = vld [vmem:[%s1 + $0x2b0] sm:$0xff]
        %v541 = vld [vmem:[%s1 + $0x2b8] sm:$0xff]
        %v542 = vld [vmem:[%s1 + $0x2c0] sm:$0xff]
        %v543 = vld [vmem:[%s1 + $0x2c8] sm:$0xff]
        %v544 = vld [vmem:[%s1 + $0x2d0] sm:$0xff]
        %v545 = vld [vmem:[%s1 + $0x2d8] sm:$0xff]
        %v546 = vld [vmem:[%s1 + $0x2e0] sm:$0xff]
        %v547 = vld [vmem:[%s1 + $0x2e8] sm:$0xff]
        %v548 = vld [vmem:[%s1 + $0x2f0] sm:$0xff]
        %v549 = vld [vmem:[%s1 + $0x2f8] sm:$0xff]
        %v550 = vld [vmem:[%s1 + $0x300] sm:$0xff]
        %v551 = vld [vmem:[%s1 + $0x308] sm:$0xff]
        %v552 = vld [vmem:[%s1 + $0x310] sm:$0xff]
        %v553 = vld [vmem:[%s1 + $0x318] sm:$0xff]
        %v554 = vld [vmem:[%s1 + $0x320] sm:$0xff]
        %v555 = vld [vmem:[%s1 + $0x328] sm:$0xff]
        %v556 = vld [vmem:[%s1 + $0x330] sm:$0xff]
        %v557 = vld [vmem:[%s1 + $0x338] sm:$0xff]
        %v558 = vld [vmem:[%s1 + $0x340] sm:$0xff]
        %v559 = vld [vmem:[%s1 + $0x348] sm:$0xff]
        %v560 = vld [vmem:[%s1 + $0x350] sm:$0xff]
        %v561 = vld [vmem:[%s1 + $0x358] sm:$0xff]
        %v562 = vld [vmem:[%s1 + $0x360] sm:$0xff]
        %v563 = vld [vmem:[%s1 + $0x368] sm:$0xff]
        %v564 = vld [vmem:[%s1 + $0x370] sm:$0xff]
        %v565 = vld [vmem:[%s1 + $0x378] sm:$0xff]
        %v566 = vld [vmem:[%s1 + $0x380] sm:$0xff]
        %v567 = vld [vmem:[%s1 + $0x388] sm:$0xff]
        %v568 = vld [vmem:[%s1 + $0x390] sm:$0xff]
        %v569 = vld [vmem:[%s1 + $0x398] sm:$0xff]
        %v570 = vld [vmem:[%s1 + $0x3a0] sm:$0xff]
        %v571 = vld [vmem:[%s1 + $0x3a8] sm:$0xff]
        %v572 = vld [vmem:[%s1 + $0x3b0] sm:$0xff]
        %v573 = vld [vmem:[%s1 + $0x3b8] sm:$0xff]
        %v574 = vld [vmem:[%s1 + $0x3c0] sm:$0xff]
        %v575 = vld [vmem:[%s1 + $0x3c8] sm:$0xff]
        %v576 = vld [vmem:[%s1 + $0x3d0] sm:$0xff]
        %v577 = vld [vmem:[%s1 + $0x3d8] sm:$0xff]
        %v578 = vld [vmem:[%s1 + $0x3e0] sm:$0xff]
        %v579 = vld [vmem:[%s1 + $0x3e8] sm:$0xff]
        %v580 = vld [vmem:[%s1 + $0x3f0] sm:$0xff]
        %v581 = vld [vmem:[%s1 + $0x3f8] sm:$0xff]
        %v582 = vld [vmem:[%s1 + $0x400] sm:$0xff]
        %v583 = vld [vmem:[%s1 + $0x408] sm:$0xff]
        %v584 = vld [vmem:[%s1 + $0x410] sm:$0xff]
        %v585 = vld [vmem:[%s1 + $0x418] sm:$0xff]
        %v586 = vld [vmem:[%s1 + $0x420] sm:$0xff]
        %v587 = vld [vmem:[%s1 + $0x428] sm:$0xff]
        %v588 = vld [vmem:[%s1 + $0x430] sm:$0xff]
        %v589 = vld [vmem:[%s1 + $0x438] sm:$0xff]
        %v590 = vld [vmem:[%s1 + $0x440] sm:$0xff]
        %v591 = vld [vmem:[%s1 + $0x448] sm:$0xff]
        %v592 = vld [vmem:[%s1 + $0x450] sm:$0xff]
        %v593 = vld [vmem:[%s1 + $0x458] sm:$0xff]
        %v594 = vld [vmem:[%s1 + $0x460] sm:$0xff]
        %v595 = vld [vmem:[%s1 + $0x468] sm:$0xff]
        %v596 = vld [vmem:[%s1 + $0x470] sm:$0xff]
        %v597 = vld [vmem:[%s1 + $0x478] sm:$0xff]
        %v598 = vld [vmem:[%s1 + $0x480] sm:$0xff]
        %v599 = vld [vmem:[%s1 + $0x488] sm:$0xff]
        %v600 = vld [vmem:[%s1 + $0x490] sm:$0xff]
        %v601 = vld [vmem:[%s1 + $0x498] sm:$0xff]
        %v602 = vld [vmem:[%s1 + $0x4a0] sm:$0xff]
        %v603 = vld [vmem:[%s1 + $0x4a8] sm:$0xff]
        %v604 = vld [vmem:[%s1 + $0x4b0] sm:$0xff]
        %v605 = vld [vmem:[%s1 + $0x4b8] sm:$0xff]
        %v606 = vld [vmem:[%s1 + $0x4c0] sm:$0xff]
        %v607 = vld [vmem:[%s1 + $0x4c8] sm:$0xff]
        %v608 = vld [vmem:[%s1 + $0x4d0] sm:$0xff]
        %v609 = vld [vmem:[%s1 + $0x4d8] sm:$0xff]
        %v610 = vld [vmem:[%s1 + $0x4e0] sm:$0xff]
        %v611 = vld [vmem:[%s1 + $0x4e8] sm:$0xff]
        %v612 = vld [vmem:[%s1 + $0x4f0] sm:$0xff]
        %v613 = vld [vmem:[%s1 + $0x4f8] sm:$0xff]
        %v614 = vld [vmem:[%s1 + $0x500] sm:$0xff]
        %v615 = vld [vmem:[%s1 + $0x508] sm:$0xff]
        %v616 = vld [vmem:[%s1 + $0x510] sm:$0xff]
        %v617 = vld [vmem:[%s1 + $0x518] sm:$0xff]
        %v618 = vld [vmem:[%s1 + $0x520] sm:$0xff]
        %v619 = vld [vmem:[%s1 + $0x528] sm:$0xff]
        %v620 = vld [vmem:[%s1 + $0x530] sm:$0xff]
        %v621 = vld [vmem:[%s1 + $0x538] sm:$0xff]
        %v622 = vld [vmem:[%s1 + $0x540] sm:$0xff]
        %v623 = vld [vmem:[%s1 + $0x548] sm:$0xff]
        %v624 = vld [vmem:[%s1 + $0x550] sm:$0xff]
        %v625 = vld [vmem:[%s1 + $0x558] sm:$0xff]
        %v626 = vld [vmem:[%s1 + $0x560] sm:$0xff]
        %v627 = vld [vmem:[%s1 + $0x568] sm:$0xff]
        %v628 = vld [vmem:[%s1 + $0x570] sm:$0xff]
        %v629 = vld [vmem:[%s1 + $0x578] sm:$0xff]
        %v630 = vld [vmem:[%s1 + $0x580] sm:$0xff]
        %v631 = vld [vmem:[%s1 + $0x588] sm:$0xff]
        %v632 = vld [vmem:[%s1 + $0x590] sm:$0xff]
        %v633 = vld [vmem:[%s1 + $0x598] sm:$0xff]
        %v634 = vld [vmem:[%s1 + $0x5a0] sm:$0xff]
        %v635 = vld [vmem:[%s1 + $0x5a8] sm:$0xff]
        %v636 = vld [vmem:[%s1 + $0x5b0] sm:$0xff]
        %v637 = vld [vmem:[%s1 + $0x5b8] sm:$0xff]
        %v638 = vld [vmem:[%s1 + $0x5c0] sm:$0xff]
        %v639 = vld [vmem:[%s1 + $0x5c8] sm:$0xff]
        %v640 = vld [vmem:[%s1 + $0x5d0] sm:$0xff]
        %v641 = vld [vmem:[%s1 + $0x5d8] sm:$0xff]
        %v642 = vld [vmem:[%s1 + $0x5e0] sm:$0xff]
        %v643 = vld [vmem:[%s1 + $0x5e8] sm:$0xff]
        %v644 = vld [vmem:[%s1 + $0x5f0] sm:$0xff]
        %v645 = vld [vmem:[%s1 + $0x5f8] sm:$0xff]
        %v646 = vld [vmem:[%s1 + $0x600] sm:$0xff]
        %v647 = vld [vmem:[%s1 + $0x608] sm:$0xff]
        %v648 = vld [vmem:[%s1 + $0x610] sm:$0xff]
        %v649 = vld [vmem:[%s1 + $0x618] sm:$0xff]
        %v650 = vld [vmem:[%s2] sm:$0xf]
        %v652 = vlaneseq
        %v653 = vshrl.u32 %v652, 7
        %v654 = vsub.s32 0, %v653
        %v655 = vrot.slane %v650, %v654
        %v656 = vlaneseq
        %v657 = vshrl.u32 %v656, 7
        %v658 = vsub.s32 1, %v657
        %v659 = vrot.slane %v650, %v658
        %v660 = vlaneseq
        %v661 = vshrl.u32 %v660, 7
        %v662 = vsub.s32 2, %v661
        %v663 = vrot.slane %v650, %v662
        %v664 = vlaneseq
        %v665 = vshrl.u32 %v664, 7
        %v666 = vsub.s32 3, %v665
        %v667 = vrot.slane %v650, %v666
        %v680 = vunpack.c.l.b16 %v446
        %v681 = vunpack.c.h.b16 %v446
        %v682 = vunpack.c.l.b16 %v447
        %v683 = vunpack.c.h.b16 %v447
        %v684 = vunpack.c.l.b16 %v448
        %v685 = vunpack.c.h.b16 %v448
        %v686 = vunpack.c.l.b16 %v449
        %v687 = vunpack.c.l.b16 %v450
        %v688 = vunpack.c.h.b16 %v450
        %v689 = vunpack.c.l.b16 %v451
        %v690 = vunpack.c.h.b16 %v451
        %v691 = vunpack.c.l.b16 %v452
        %v692 = vunpack.c.h.b16 %v452
        %v693 = vunpack.c.l.b16 %v453
        %v694 = vpack.c.b16 %v687, %v680
        %v695 = vpack.c.b16 %v688, %v681
        %v696 = vpack.c.b16 %v689, %v682
        %v697 = vpack.c.b16 %v690, %v683
        %v698 = vpack.c.b16 %v691, %v684
        %v699 = vpack.c.b16 %v692, %v685
        %v700 = vpack.c.b16 %v693, %v686
        %v903 = vunpack.c.l.b16 %v454
        %v904 = vunpack.c.h.b16 %v454
        %v905 = vunpack.c.l.b16 %v455
        %v906 = vunpack.c.h.b16 %v455
        %v907 = vunpack.c.l.b16 %v456
        %v908 = vunpack.c.h.b16 %v456
        %v909 = vunpack.c.l.b16 %v457
        %v910 = vunpack.c.h.b16 %v457
        %v911 = vunpack.c.l.b16 %v458
        %v912 = vunpack.c.h.b16 %v458
        %v913 = vunpack.c.l.b16 %v459
        %v914 = vunpack.c.h.b16 %v459
        %v915 = vunpack.c.l.b16 %v460
        %v916 = vunpack.c.h.b16 %v460
        %v917 = vunpack.c.l.b16 %v461
        %v918 = vunpack.c.h.b16 %v461
        %v919 = vunpack.c.l.b16 %v462
        %v920 = vunpack.c.h.b16 %v462
        %v921 = vunpack.c.l.b16 %v463
        %v922 = vunpack.c.h.b16 %v463
        %v923 = vunpack.c.l.b16 %v464
        %v924 = vunpack.c.h.b16 %v464
        %v925 = vunpack.c.l.b16 %v465
        %v926 = vunpack.c.h.b16 %v465
        %v927 = vunpack.c.l.b16 %v466
        %v928 = vunpack.c.h.b16 %v466
        %v929 = vunpack.c.l.b16 %v467
        %v930 = vunpack.c.h.b16 %v467
        %v931 = vunpack.c.l.b16 %v468
        %v932 = vunpack.c.h.b16 %v468
        %v933 = vunpack.c.l.b16 %v469
        %v934 = vunpack.c.h.b16 %v469
        %v935 = vunpack.c.l.b16 %v470
        %v936 = vunpack.c.h.b16 %v470
        %v937 = vunpack.c.l.b16 %v471
        %v938 = vunpack.c.h.b16 %v471
        %v939 = vunpack.c.l.b16 %v472
        %v940 = vunpack.c.h.b16 %v472
        %v941 = vunpack.c.l.b16 %v473
        %v942 = vunpack.c.h.b16 %v473
        %v943 = vunpack.c.l.b16 %v474
        %v944 = vunpack.c.h.b16 %v474
        %v945 = vunpack.c.l.b16 %v475
        %v946 = vunpack.c.h.b16 %v475
        %v947 = vunpack.c.l.b16 %v476
        %v948 = vunpack.c.h.b16 %v476
        %v949 = vunpack.c.l.b16 %v477
        %v950 = vunpack.c.h.b16 %v477
        %v951 = vunpack.c.l.b16 %v478
        %v952 = vunpack.c.h.b16 %v478
        %v953 = vunpack.c.l.b16 %v479
        %v954 = vunpack.c.h.b16 %v479
        %v955 = vunpack.c.l.b16 %v480
        %v956 = vunpack.c.h.b16 %v480
        %v957 = vunpack.c.l.b16 %v481
        %v958 = vunpack.c.h.b16 %v481
        %v959 = vunpack.c.l.b16 %v482
        %v960 = vunpack.c.h.b16 %v482
        %v961 = vunpack.c.l.b16 %v483
        %v962 = vunpack.c.h.b16 %v483
        %v963 = vunpack.c.l.b16 %v484
        %v964 = vunpack.c.h.b16 %v484
        %v965 = vunpack.c.l.b16 %v485
        %v966 = vunpack.c.h.b16 %v485
        %v967 = vunpack.c.l.b16 %v486
        %v968 = vunpack.c.h.b16 %v486
        %v969 = vunpack.c.l.b16 %v487
        %v970 = vunpack.c.h.b16 %v487
        %v971 = vunpack.c.l.b16 %v488
        %v972 = vunpack.c.h.b16 %v488
        %v973 = vunpack.c.l.b16 %v489
        %v974 = vunpack.c.h.b16 %v489
        %v975 = vunpack.c.l.b16 %v490
        %v976 = vunpack.c.h.b16 %v490
        %v977 = vunpack.c.l.b16 %v491
        %v978 = vunpack.c.h.b16 %v491
        %v979 = vunpack.c.l.b16 %v492
        %v980 = vunpack.c.h.b16 %v492
        %v981 = vunpack.c.l.b16 %v493
        %v982 = vunpack.c.h.b16 %v493
        %v983 = vunpack.c.l.b16 %v494
        %v984 = vunpack.c.h.b16 %v494
        %v985 = vunpack.c.l.b16 %v495
        %v986 = vunpack.c.h.b16 %v495
        %v987 = vunpack.c.l.b16 %v496
        %v988 = vunpack.c.h.b16 %v496
        %v989 = vunpack.c.l.b16 %v497
        %v990 = vunpack.c.h.b16 %v497
        %v991 = vunpack.c.l.b16 %v498
        %v992 = vunpack.c.h.b16 %v498
        %v993 = vunpack.c.l.b16 %v499
        %v994 = vunpack.c.h.b16 %v499
        %v995 = vunpack.c.l.b16 %v500
        %v996 = vunpack.c.h.b16 %v500
        %v997 = vunpack.c.l.b16 %v501
        %v998 = vunpack.c.h.b16 %v501
        %v999 = vunpack.c.l.b16 %v502
        %v1000 = vunpack.c.h.b16 %v502
        %v1001 = vunpack.c.l.b16 %v503
        %v1002 = vunpack.c.h.b16 %v503
        %v1003 = vunpack.c.l.b16 %v504
        %v1004 = vunpack.c.h.b16 %v504
        %v1005 = vunpack.c.l.b16 %v505
        %v1006 = vunpack.c.h.b16 %v505
        %v1007 = vunpack.c.l.b16 %v506
        %v1008 = vunpack.c.h.b16 %v506
        %v1009 = vunpack.c.l.b16 %v507
        %v1010 = vunpack.c.h.b16 %v507
        %v1011 = vunpack.c.l.b16 %v508
        %v1012 = vunpack.c.h.b16 %v508
        %v1013 = vunpack.c.l.b16 %v509
        %v1014 = vunpack.c.h.b16 %v509
        %v1015 = vunpack.c.l.b16 %v510
        %v1016 = vunpack.c.h.b16 %v510
        %v1017 = vunpack.c.l.b16 %v511
        %v1018 = vunpack.c.h.b16 %v511
        %v1019 = vunpack.c.l.b16 %v512
        %v1020 = vunpack.c.h.b16 %v512
        %v1021 = vunpack.c.l.b16 %v513
        %v1022 = vunpack.c.h.b16 %v513
        %v1023 = vunpack.c.l.b16 %v514
        %v1024 = vunpack.c.h.b16 %v514
        %v1025 = vunpack.c.l.b16 %v515
        %v1026 = vunpack.c.h.b16 %v515
        %v1027 = vunpack.c.l.b16 %v516
        %v1028 = vunpack.c.h.b16 %v516
        %v1029 = vunpack.c.l.b16 %v517
        %v1030 = vunpack.c.h.b16 %v517
        %v1031 = vunpack.c.l.b16 %v518
        %v1032 = vunpack.c.h.b16 %v518
        %v1033 = vunpack.c.l.b16 %v519
        %v1034 = vunpack.c.h.b16 %v519
        %v1035 = vunpack.c.l.b16 %v520
        %v1036 = vunpack.c.h.b16 %v520
        %v1037 = vunpack.c.l.b16 %v521
        %v1038 = vunpack.c.h.b16 %v521
        %v1039 = vunpack.c.l.b16 %v522
        %v1040 = vunpack.c.h.b16 %v522
        %v1041 = vunpack.c.l.b16 %v523
        %v1042 = vunpack.c.h.b16 %v523
        %v1043 = vunpack.c.l.b16 %v524
        %v1044 = vunpack.c.h.b16 %v524
        %v1045 = vunpack.c.l.b16 %v525
        %v1046 = vunpack.c.h.b16 %v525
        %v1047 = vunpack.c.l.b16 %v526
        %v1048 = vunpack.c.h.b16 %v526
        %v1049 = vunpack.c.l.b16 %v527
        %v1050 = vunpack.c.h.b16 %v527
        %v1051 = vunpack.c.l.b16 %v528
        %v1052 = vunpack.c.h.b16 %v528
        %v1053 = vunpack.c.l.b16 %v529
        %v1054 = vunpack.c.h.b16 %v529
        %v1055 = vunpack.c.l.b16 %v530
        %v1056 = vunpack.c.h.b16 %v530
        %v1057 = vunpack.c.l.b16 %v531
        %v1058 = vunpack.c.h.b16 %v531
        %v1059 = vunpack.c.l.b16 %v532
        %v1060 = vunpack.c.h.b16 %v532
        %v1061 = vunpack.c.l.b16 %v533
        %v1062 = vunpack.c.h.b16 %v533
        %v1063 = vunpack.c.l.b16 %v534
        %v1064 = vunpack.c.h.b16 %v534
        %v1065 = vunpack.c.l.b16 %v535
        %v1066 = vunpack.c.h.b16 %v535
        %v1067 = vunpack.c.l.b16 %v536
        %v1068 = vunpack.c.h.b16 %v536
        %v1069 = vunpack.c.l.b16 %v537
        %v1070 = vunpack.c.h.b16 %v537
        %v1071 = vunpack.c.l.b16 %v538
        %v1072 = vunpack.c.h.b16 %v538
        %v1073 = vunpack.c.l.b16 %v539
        %v1074 = vunpack.c.h.b16 %v539
        %v1075 = vunpack.c.l.b16 %v540
        %v1076 = vunpack.c.h.b16 %v540
        %v1077 = vunpack.c.l.b16 %v541
        %v1078 = vunpack.c.h.b16 %v541
        %v1079 = vunpack.c.l.b16 %v542
        %v1080 = vunpack.c.h.b16 %v542
        %v1081 = vunpack.c.l.b16 %v543
        %v1082 = vunpack.c.h.b16 %v543
        %v1083 = vunpack.c.l.b16 %v544
        %v1084 = vunpack.c.h.b16 %v544
        %v1085 = vunpack.c.l.b16 %v545
        %v1086 = vunpack.c.h.b16 %v545
        %v1087 = vunpack.c.l.b16 %v546
        %v1088 = vunpack.c.h.b16 %v546
        %v1089 = vunpack.c.l.b16 %v547
        %v1090 = vunpack.c.h.b16 %v547
        %v1091 = vunpack.c.l.b16 %v548
        %v1092 = vunpack.c.h.b16 %v548
        %v1093 = vunpack.c.l.b16 %v549
        %v1094 = vunpack.c.h.b16 %v549
        %v1095 = vunpack.c.l.b16 %v550
        %v1096 = vunpack.c.h.b16 %v550
        %v1097 = vunpack.c.l.b16 %v551
        %v1098 = vunpack.c.h.b16 %v551
        %v1099 = vunpack.c.l.b16 %v552
        %v1100 = vunpack.c.h.b16 %v552
        %v1101 = vunpack.c.l.b16 %v553
        %v1102 = vunpack.c.h.b16 %v553
        %v1103 = vunpack.c.l.b16 %v554
        %v1104 = vunpack.c.h.b16 %v554
        %v1105 = vunpack.c.l.b16 %v555
        %v1106 = vunpack.c.h.b16 %v555
        %v1107 = vunpack.c.l.b16 %v556
        %v1108 = vunpack.c.h.b16 %v556
        %v1109 = vunpack.c.l.b16 %v557
        %v1110 = vunpack.c.h.b16 %v557
        %v1111 = vunpack.c.l.b16 %v558
        %v1112 = vunpack.c.h.b16 %v558
        %v1113 = vunpack.c.l.b16 %v559
        %v1114 = vunpack.c.h.b16 %v559
        %v1115 = vunpack.c.l.b16 %v560
        %v1116 = vunpack.c.h.b16 %v560
        %v1117 = vunpack.c.l.b16 %v561
        %v1118 = vunpack.c.h.b16 %v561
        %v1119 = vunpack.c.l.b16 %v562
        %v1120 = vunpack.c.h.b16 %v562
        %v1121 = vunpack.c.l.b16 %v563
        %v1122 = vunpack.c.h.b16 %v563
        %v1123 = vunpack.c.l.b16 %v564
        %v1124 = vunpack.c.h.b16 %v564
        %v1125 = vunpack.c.l.b16 %v565
        %v1126 = vunpack.c.h.b16 %v565
        %v1127 = vunpack.c.l.b16 %v566
        %v1128 = vunpack.c.h.b16 %v566
        %v1129 = vunpack.c.l.b16 %v567
        %v1130 = vunpack.c.h.b16 %v567
        %v1131 = vunpack.c.l.b16 %v568
        %v1132 = vunpack.c.h.b16 %v568
        %v1133 = vunpack.c.l.b16 %v569
        %v1134 = vunpack.c.h.b16 %v569
        %v1135 = vunpack.c.l.b16 %v570
        %v1136 = vunpack.c.h.b16 %v570
        %v1137 = vunpack.c.l.b16 %v571
        %v1138 = vunpack.c.h.b16 %v571
        %v1139 = vunpack.c.l.b16 %v572
        %v1140 = vunpack.c.h.b16 %v572
        %v1141 = vunpack.c.l.b16 %v573
        %v1142 = vunpack.c.h.b16 %v573
        %v1143 = vunpack.c.l.b16 %v574
        %v1144 = vunpack.c.h.b16 %v574
        %v1145 = vunpack.c.l.b16 %v575
        %v1146 = vunpack.c.h.b16 %v575
        %v1147 = vunpack.c.l.b16 %v576
        %v1148 = vunpack.c.h.b16 %v576
        %v1149 = vunpack.c.l.b16 %v577
        %v1150 = vunpack.c.h.b16 %v577
        %v1151 = vunpack.c.l.b16 %v578
        %v1152 = vunpack.c.h.b16 %v578
        %v1153 = vunpack.c.l.b16 %v579
        %v1154 = vunpack.c.h.b16 %v579
        %v1155 = vunpack.c.l.b16 %v580
        %v1156 = vunpack.c.h.b16 %v580
        %v1157 = vunpack.c.l.b16 %v581
        %v1158 = vunpack.c.h.b16 %v581
        %v1159 = vunpack.c.l.b16 %v582
        %v1160 = vunpack.c.h.b16 %v582
        %v1161 = vunpack.c.l.b16 %v583
        %v1162 = vunpack.c.h.b16 %v583
        %v1163 = vunpack.c.l.b16 %v584
        %v1164 = vunpack.c.h.b16 %v584
        %v1165 = vunpack.c.l.b16 %v585
        %v1166 = vunpack.c.h.b16 %v585
        %v1167 = vunpack.c.l.b16 %v586
        %v1168 = vunpack.c.h.b16 %v586
        %v1169 = vunpack.c.l.b16 %v587
        %v1170 = vunpack.c.h.b16 %v587
        %v1171 = vunpack.c.l.b16 %v588
        %v1172 = vunpack.c.h.b16 %v588
        %v1173 = vunpack.c.l.b16 %v589
        %v1174 = vunpack.c.h.b16 %v589
        %v1175 = vunpack.c.l.b16 %v590
        %v1176 = vunpack.c.h.b16 %v590
        %v1177 = vunpack.c.l.b16 %v591
        %v1178 = vunpack.c.h.b16 %v591
        %v1179 = vunpack.c.l.b16 %v592
        %v1180 = vunpack.c.h.b16 %v592
        %v1181 = vunpack.c.l.b16 %v593
        %v1182 = vunpack.c.h.b16 %v593
        %v1183 = vunpack.c.l.b16 %v594
        %v1184 = vunpack.c.h.b16 %v594
        %v1185 = vunpack.c.l.b16 %v595
        %v1186 = vunpack.c.h.b16 %v595
        %v1187 = vunpack.c.l.b16 %v596
        %v1188 = vunpack.c.h.b16 %v596
        %v1189 = vunpack.c.l.b16 %v597
        %v1190 = vunpack.c.h.b16 %v597
        %v1191 = vunpack.c.l.b16 %v598
        %v1192 = vunpack.c.h.b16 %v598
        %v1193 = vunpack.c.l.b16 %v599
        %v1194 = vunpack.c.h.b16 %v599
        %v1195 = vunpack.c.l.b16 %v600
        %v1196 = vunpack.c.h.b16 %v600
        %v1197 = vunpack.c.l.b16 %v601
        %v1198 = vunpack.c.h.b16 %v601
        %v1199 = vunpack.c.l.b16 %v602
        %v1200 = vunpack.c.h.b16 %v602
        %v1201 = vunpack.c.l.b16 %v603
        %v1202 = vunpack.c.h.b16 %v603
        %v1203 = vunpack.c.l.b16 %v604
        %v1204 = vunpack.c.h.b16 %v604
        %v1205 = vunpack.c.l.b16 %v605
        %v1206 = vunpack.c.h.b16 %v605
        %v1207 = vunpack.c.l.b16 %v606
        %v1208 = vunpack.c.h.b16 %v606
        %v1209 = vunpack.c.l.b16 %v607
        %v1210 = vunpack.c.h.b16 %v607
        %v1211 = vunpack.c.l.b16 %v608
        %v1212 = vunpack.c.h.b16 %v608
        %v1213 = vunpack.c.l.b16 %v609
        %v1214 = vunpack.c.h.b16 %v609
        %v1215 = vunpack.c.l.b16 %v610
        %v1216 = vunpack.c.h.b16 %v610
        %v1217 = vunpack.c.l.b16 %v611
        %v1218 = vunpack.c.h.b16 %v611
        %v1219 = vunpack.c.l.b16 %v612
        %v1220 = vunpack.c.h.b16 %v612
        %v1221 = vunpack.c.l.b16 %v613
        %v1222 = vunpack.c.h.b16 %v613
        %v1223 = vunpack.c.l.b16 %v614
        %v1224 = vunpack.c.h.b16 %v614
        %v1225 = vunpack.c.l.b16 %v615
        %v1226 = vunpack.c.h.b16 %v615
        %v1227 = vunpack.c.l.b16 %v616
        %v1228 = vunpack.c.h.b16 %v616
        %v1229 = vunpack.c.l.b16 %v617
        %v1230 = vunpack.c.h.b16 %v617
        %v1231 = vunpack.c.l.b16 %v618
        %v1232 = vunpack.c.h.b16 %v618
        %v1233 = vunpack.c.l.b16 %v619
        %v1234 = vunpack.c.h.b16 %v619
        %v1235 = vunpack.c.l.b16 %v620
        %v1236 = vunpack.c.h.b16 %v620
        %v1237 = vunpack.c.l.b16 %v621
        %v1238 = vunpack.c.h.b16 %v621
        %v1239 = vunpack.c.l.b16 %v622
        %v1240 = vunpack.c.h.b16 %v622
        %v1241 = vunpack.c.l.b16 %v623
        %v1242 = vunpack.c.h.b16 %v623
        %v1243 = vunpack.c.l.b16 %v624
        %v1244 = vunpack.c.h.b16 %v624
        %v1245 = vunpack.c.l.b16 %v625
        %v1246 = vunpack.c.h.b16 %v625
        %v1247 = vunpack.c.l.b16 %v626
        %v1248 = vunpack.c.h.b16 %v626
        %v1249 = vunpack.c.l.b16 %v627
        %v1250 = vunpack.c.h.b16 %v627
        %v1251 = vunpack.c.l.b16 %v628
        %v1252 = vunpack.c.h.b16 %v628
        %v1253 = vunpack.c.l.b16 %v629
        %v1254 = vunpack.c.h.b16 %v629
        %v1255 = vunpack.c.l.b16 %v630
        %v1256 = vunpack.c.h.b16 %v630
        %v1257 = vunpack.c.l.b16 %v631
        %v1258 = vunpack.c.h.b16 %v631
        %v1259 = vunpack.c.l.b16 %v632
        %v1260 = vunpack.c.h.b16 %v632
        %v1261 = vunpack.c.l.b16 %v633
        %v1262 = vunpack.c.h.b16 %v633
        %v1263 = vunpack.c.l.b16 %v634
        %v1264 = vunpack.c.h.b16 %v634
        %v1265 = vunpack.c.l.b16 %v635
        %v1266 = vunpack.c.h.b16 %v635
        %v1267 = vunpack.c.l.b16 %v636
        %v1268 = vunpack.c.h.b16 %v636
        %v1269 = vunpack.c.l.b16 %v637
        %v1270 = vunpack.c.h.b16 %v637
        %v1271 = vunpack.c.l.b16 %v638
        %v1272 = vunpack.c.h.b16 %v638
        %v1273 = vunpack.c.l.b16 %v639
        %v1274 = vunpack.c.h.b16 %v639
        %v1275 = vunpack.c.l.b16 %v640
        %v1276 = vunpack.c.h.b16 %v640
        %v1277 = vunpack.c.l.b16 %v641
        %v1278 = vunpack.c.h.b16 %v641
        %v1279 = vunpack.c.l.b16 %v642
        %v1280 = vunpack.c.h.b16 %v642
        %v1281 = vunpack.c.l.b16 %v643
        %v1282 = vunpack.c.h.b16 %v643
        %v1283 = vunpack.c.l.b16 %v644
        %v1284 = vunpack.c.h.b16 %v644
        %v1285 = vunpack.c.l.b16 %v645
        %v1286 = vunpack.c.h.b16 %v645
        %v1287 = vunpack.c.l.b16 %v646
        %v1288 = vunpack.c.h.b16 %v646
        %v1289 = vunpack.c.l.b16 %v647
        %v1290 = vunpack.c.h.b16 %v647
        %v1291 = vunpack.c.l.b16 %v648
        %v1292 = vunpack.c.h.b16 %v648
        %v1293 = vunpack.c.l.b16 %v649
        %v1294 = vunpack.c.h.b16 %v649
        %v1295 = vpack.c.b16 %v907, %v903
        %v1296 = vpack.c.b16 %v908, %v904
        %v1297 = vpack.c.b16 %v909, %v905
        %v1298 = vpack.c.b16 %v910, %v906
        %v1299 = vpack.c.b16 %v915, %v911
        %v1300 = vpack.c.b16 %v916, %v912
        %v1301 = vpack.c.b16 %v917, %v913
        %v1302 = vpack.c.b16 %v918, %v914
        %v1303 = vpack.c.b16 %v923, %v919
        %v1304 = vpack.c.b16 %v924, %v920
        %v1305 = vpack.c.b16 %v925, %v921
        %v1306 = vpack.c.b16 %v926, %v922
        %v1307 = vpack.c.b16 %v931, %v927
        %v1308 = vpack.c.b16 %v932, %v928
        %v1309 = vpack.c.b16 %v933, %v929
        %v1310 = vpack.c.b16 %v934, %v930
        %v1311 = vpack.c.b16 %v939, %v935
        %v1312 = vpack.c.b16 %v940, %v936
        %v1313 = vpack.c.b16 %v941, %v937
        %v1314 = vpack.c.b16 %v942, %v938
        %v1315 = vpack.c.b16 %v947, %v943
        %v1316 = vpack.c.b16 %v948, %v944
        %v1317 = vpack.c.b16 %v949, %v945
        %v1318 = vpack.c.b16 %v950, %v946
        %v1319 = vpack.c.b16 %v955, %v951
        %v1320 = vpack.c.b16 %v956, %v952
        %v1321 = vpack.c.b16 %v957, %v953
        %v1322 = vpack.c.b16 %v958, %v954
        %v1323 = vpack.c.b16 %v963, %v959
        %v1324 = vpack.c.b16 %v964, %v960
        %v1325 = vpack.c.b16 %v965, %v961
        %v1326 = vpack.c.b16 %v966, %v962
        %v1327 = vpack.c.b16 %v971, %v967
        %v1328 = vpack.c.b16 %v972, %v968
        %v1329 = vpack.c.b16 %v973, %v969
        %v1330 = vpack.c.b16 %v974, %v970
        %v1331 = vpack.c.b16 %v979, %v975
        %v1332 = vpack.c.b16 %v980, %v976
        %v1333 = vpack.c.b16 %v981, %v977
        %v1334 = vpack.c.b16 %v982, %v978
        %v1335 = vpack.c.b16 %v987, %v983
        %v1336 = vpack.c.b16 %v988, %v984
        %v1337 = vpack.c.b16 %v989, %v985
        %v1338 = vpack.c.b16 %v990, %v986
        %v1339 = vpack.c.b16 %v995, %v991
        %v1340 = vpack.c.b16 %v996, %v992
        %v1341 = vpack.c.b16 %v997, %v993
        %v1342 = vpack.c.b16 %v998, %v994
        %v1343 = vpack.c.b16 %v1003, %v999
        %v1344 = vpack.c.b16 %v1004, %v1000
        %v1345 = vpack.c.b16 %v1005, %v1001
        %v1346 = vpack.c.b16 %v1006, %v1002
        %v1347 = vpack.c.b16 %v1011, %v1007
        %v1348 = vpack.c.b16 %v1012, %v1008
        %v1349 = vpack.c.b16 %v1013, %v1009
        %v1350 = vpack.c.b16 %v1014, %v1010
        %v1351 = vpack.c.b16 %v1019, %v1015
        %v1352 = vpack.c.b16 %v1020, %v1016
        %v1353 = vpack.c.b16 %v1021, %v1017
        %v1354 = vpack.c.b16 %v1022, %v1018
        %v1355 = vpack.c.b16 %v1027, %v1023
        %v1356 = vpack.c.b16 %v1028, %v1024
        %v1357 = vpack.c.b16 %v1029, %v1025
        %v1358 = vpack.c.b16 %v1030, %v1026
        %v1359 = vpack.c.b16 %v1035, %v1031
        %v1360 = vpack.c.b16 %v1036, %v1032
        %v1361 = vpack.c.b16 %v1037, %v1033
        %v1362 = vpack.c.b16 %v1038, %v1034
        %v1363 = vpack.c.b16 %v1043, %v1039
        %v1364 = vpack.c.b16 %v1044, %v1040
        %v1365 = vpack.c.b16 %v1045, %v1041
        %v1366 = vpack.c.b16 %v1046, %v1042
        %v1367 = vpack.c.b16 %v1051, %v1047
        %v1368 = vpack.c.b16 %v1052, %v1048
        %v1369 = vpack.c.b16 %v1053, %v1049
        %v1370 = vpack.c.b16 %v1054, %v1050
        %v1371 = vpack.c.b16 %v1059, %v1055
        %v1372 = vpack.c.b16 %v1060, %v1056
        %v1373 = vpack.c.b16 %v1061, %v1057
        %v1374 = vpack.c.b16 %v1062, %v1058
        %v1375 = vpack.c.b16 %v1067, %v1063
        %v1376 = vpack.c.b16 %v1068, %v1064
        %v1377 = vpack.c.b16 %v1069, %v1065
        %v1378 = vpack.c.b16 %v1070, %v1066
        %v1379 = vpack.c.b16 %v1075, %v1071
        %v1380 = vpack.c.b16 %v1076, %v1072
        %v1381 = vpack.c.b16 %v1077, %v1073
        %v1382 = vpack.c.b16 %v1078, %v1074
        %v1383 = vpack.c.b16 %v1083, %v1079
        %v1384 = vpack.c.b16 %v1084, %v1080
        %v1385 = vpack.c.b16 %v1085, %v1081
        %v1386 = vpack.c.b16 %v1086, %v1082
        %v1387 = vpack.c.b16 %v1091, %v1087
        %v1388 = vpack.c.b16 %v1092, %v1088
        %v1389 = vpack.c.b16 %v1093, %v1089
        %v1390 = vpack.c.b16 %v1094, %v1090
        %v1391 = vpack.c.b16 %v1099, %v1095
        %v1392 = vpack.c.b16 %v1100, %v1096
        %v1393 = vpack.c.b16 %v1101, %v1097
        %v1394 = vpack.c.b16 %v1102, %v1098
        %v1395 = vpack.c.b16 %v1107, %v1103
        %v1396 = vpack.c.b16 %v1108, %v1104
        %v1397 = vpack.c.b16 %v1109, %v1105
        %v1398 = vpack.c.b16 %v1110, %v1106
        %v1399 = vpack.c.b16 %v1115, %v1111
        %v1400 = vpack.c.b16 %v1116, %v1112
        %v1401 = vpack.c.b16 %v1117, %v1113
        %v1402 = vpack.c.b16 %v1118, %v1114
        %v1403 = vpack.c.b16 %v1123, %v1119
        %v1404 = vpack.c.b16 %v1124, %v1120
        %v1405 = vpack.c.b16 %v1125, %v1121
        %v1406 = vpack.c.b16 %v1126, %v1122
        %v1407 = vpack.c.b16 %v1131, %v1127
        %v1408 = vpack.c.b16 %v1132, %v1128
        %v1409 = vpack.c.b16 %v1133, %v1129
        %v1410 = vpack.c.b16 %v1134, %v1130
        %v1411 = vpack.c.b16 %v1139, %v1135
        %v1412 = vpack.c.b16 %v1140, %v1136
        %v1413 = vpack.c.b16 %v1141, %v1137
        %v1414 = vpack.c.b16 %v1142, %v1138
        %v1415 = vpack.c.b16 %v1147, %v1143
        %v1416 = vpack.c.b16 %v1148, %v1144
        %v1417 = vpack.c.b16 %v1149, %v1145
        %v1418 = vpack.c.b16 %v1150, %v1146
        %v1419 = vpack.c.b16 %v1155, %v1151
        %v1420 = vpack.c.b16 %v1156, %v1152
        %v1421 = vpack.c.b16 %v1157, %v1153
        %v1422 = vpack.c.b16 %v1158, %v1154
        %v1423 = vpack.c.b16 %v1163, %v1159
        %v1424 = vpack.c.b16 %v1164, %v1160
        %v1425 = vpack.c.b16 %v1165, %v1161
        %v1426 = vpack.c.b16 %v1166, %v1162
        %v1427 = vpack.c.b16 %v1171, %v1167
        %v1428 = vpack.c.b16 %v1172, %v1168
        %v1429 = vpack.c.b16 %v1173, %v1169
        %v1430 = vpack.c.b16 %v1174, %v1170
        %v1431 = vpack.c.b16 %v1179, %v1175
        %v1432 = vpack.c.b16 %v1180, %v1176
        %v1433 = vpack.c.b16 %v1181, %v1177
        %v1434 = vpack.c.b16 %v1182, %v1178
        %v1435 = vpack.c.b16 %v1187, %v1183
        %v1436 = vpack.c.b16 %v1188, %v1184
        %v1437 = vpack.c.b16 %v1189, %v1185
        %v1438 = vpack.c.b16 %v1190, %v1186
        %v1439 = vpack.c.b16 %v1195, %v1191
        %v1440 = vpack.c.b16 %v1196, %v1192
        %v1441 = vpack.c.b16 %v1197, %v1193
        %v1442 = vpack.c.b16 %v1198, %v1194
        %v1443 = vpack.c.b16 %v1203, %v1199
        %v1444 = vpack.c.b16 %v1204, %v1200
        %v1445 = vpack.c.b16 %v1205, %v1201
        %v1446 = vpack.c.b16 %v1206, %v1202
        %v1447 = vpack.c.b16 %v1211, %v1207
        %v1448 = vpack.c.b16 %v1212, %v1208
        %v1449 = vpack.c.b16 %v1213, %v1209
        %v1450 = vpack.c.b16 %v1214, %v1210
        %v1451 = vpack.c.b16 %v1219, %v1215
        %v1452 = vpack.c.b16 %v1220, %v1216
        %v1453 = vpack.c.b16 %v1221, %v1217
        %v1454 = vpack.c.b16 %v1222, %v1218
        %v1455 = vpack.c.b16 %v1227, %v1223
        %v1456 = vpack.c.b16 %v1228, %v1224
        %v1457 = vpack.c.b16 %v1229, %v1225
        %v1458 = vpack.c.b16 %v1230, %v1226
        %v1459 = vpack.c.b16 %v1235, %v1231
        %v1460 = vpack.c.b16 %v1236, %v1232
        %v1461 = vpack.c.b16 %v1237, %v1233
        %v1462 = vpack.c.b16 %v1238, %v1234
        %v1463 = vpack.c.b16 %v1243, %v1239
        %v1464 = vpack.c.b16 %v1244, %v1240
        %v1465 = vpack.c.b16 %v1245, %v1241
        %v1466 = vpack.c.b16 %v1246, %v1242
        %v1467 = vpack.c.b16 %v1251, %v1247
        %v1468 = vpack.c.b16 %v1252, %v1248
        %v1469 = vpack.c.b16 %v1253, %v1249
        %v1470 = vpack.c.b16 %v1254, %v1250
        %v1471 = vpack.c.b16 %v1259, %v1255
        %v1472 = vpack.c.b16 %v1260, %v1256
        %v1473 = vpack.c.b16 %v1261, %v1257
        %v1474 = vpack.c.b16 %v1262, %v1258
        %v1475 = vpack.c.b16 %v1267, %v1263
        %v1476 = vpack.c.b16 %v1268, %v1264
        %v1477 = vpack.c.b16 %v1269, %v1265
        %v1478 = vpack.c.b16 %v1270, %v1266
        %v1479 = vpack.c.b16 %v1275, %v1271
        %v1480 = vpack.c.b16 %v1276, %v1272
        %v1481 = vpack.c.b16 %v1277, %v1273
        %v1482 = vpack.c.b16 %v1278, %v1274
        %v1483 = vpack.c.b16 %v1283, %v1279
        %v1484 = vpack.c.b16 %v1284, %v1280
        %v1485 = vpack.c.b16 %v1285, %v1281
        %v1486 = vpack.c.b16 %v1286, %v1282
        %v1487 = vpack.c.b16 %v1291, %v1287
        %v1488 = vpack.c.b16 %v1292, %v1288
        %v1489 = vpack.c.b16 %v1293, %v1289
        %v1490 = vpack.c.b16 %v1294, %v1290
        %vm1687 = vcmask 130048
        %v1689 = vsel %vm1687, %v700, 0
        %1691 = vmatprep.subr.bf16.mxu0 %v1296
        %1692 = vmatpush1.bf16.msra.mxu0 %v1295
        %1693 = vmatprep.subr.bf16.mxu0 %v1300
        %1694 = vmatpush1.bf16.msra.mxu0 %v1299
        %1695 = vmatprep.subr.bf16.mxu0 %v1304
        %1696 = vmatpush1.bf16.msra.mxu0 %v1303
        %1697 = vmatprep.subr.bf16.mxu0 %v1308
        %1698 = vmatpush1.bf16.msra.mxu0 %v1307
        %1699 = vmatprep.subr.bf16.mxu0 %v1312
        %1700 = vmatpush1.bf16.msra.mxu0 %v1311
        %1701 = vmatprep.subr.bf16.mxu0 %v1316
        %1702 = vmatpush1.bf16.msra.mxu0 %v1315
        %1703 = vmatprep.subr.bf16.mxu0 %v1320
        %1704 = vmatpush1.bf16.msra.mxu0 %v1319
        %1705 = vmatprep.subr.bf16.mxu0 %v1324
        %1706 = vmatpush1.bf16.msra.mxu0 %v1323
        %1707 = vmatprep.subr.bf16.mxu0 %v1328
        %1708 = vmatpush1.bf16.msra.mxu0 %v1327
        %1709 = vmatprep.subr.bf16.mxu0 %v1332
        %1710 = vmatpush1.bf16.msra.mxu0 %v1331
        %1711 = vmatprep.subr.bf16.mxu0 %v1336
        %1712 = vmatpush1.bf16.msra.mxu0 %v1335
        %1713 = vmatprep.subr.bf16.mxu0 %v1340
        %1714 = vmatpush1.bf16.msra.mxu0 %v1339
        %1715 = vmatprep.subr.bf16.mxu0 %v1344
        %1716 = vmatpush1.bf16.msra.mxu0 %v1343
        %1717 = vmatprep.subr.bf16.mxu0 %v1348
        %1718 = vmatpush1.bf16.msra.mxu0 %v1347
        %1719 = vmatprep.subr.bf16.mxu0 %v1352
        %1720 = vmatpush1.bf16.msra.mxu0 %v1351
        %1721 = vmatprep.subr.bf16.mxu0 %v1356
        %1722 = vmatpush1.bf16.msra.mxu0 %v1355
        %1723 = vmatprep.mubr.bf16.mxu0 %v695
        %1724 = vmatmul.mubr.bf16.gmra.mrb[0].mxu0 %v694
        %v1725 = vpop.f32.mrb[0].mxu0
        %v1726 = vadd.f32 %v655, %v1725
        %v1727 = vpop.f32.mrb[0].mxu0
        %v1728 = vadd.f32 %v659, %v1727
        %v1729 = vpop.f32.mrb[0].mxu0
        %v1730 = vadd.f32 %v655, %v1729
        %v1731 = vpop.f32.mrb[0].mxu0
        %v1732 = vadd.f32 %v659, %v1731
        %1733 = vdwg.mxu0
        %1734 = vmatprep.subr.bf16.mxu0 %v1360
        %1735 = vmatpush1.bf16.msra.mxu0 %v1359
        %1736 = vmatprep.subr.bf16.mxu0 %v1364
        %1737 = vmatpush1.bf16.msra.mxu0 %v1363
        %1738 = vmatprep.subr.bf16.mxu0 %v1368
        %1739 = vmatpush1.bf16.msra.mxu0 %v1367
        %1740 = vmatprep.subr.bf16.mxu0 %v1372
        %1741 = vmatpush1.bf16.msra.mxu0 %v1371
        %1742 = vmatprep.subr.bf16.mxu0 %v1376
        %1743 = vmatpush1.bf16.msra.mxu0 %v1375
        %1744 = vmatprep.subr.bf16.mxu0 %v1380
        %1745 = vmatpush1.bf16.msra.mxu0 %v1379
        %1746 = vmatprep.subr.bf16.mxu0 %v1384
        %1747 = vmatpush1.bf16.msra.mxu0 %v1383
        %1748 = vmatprep.subr.bf16.mxu0 %v1388
        %1749 = vmatpush1.bf16.msra.mxu0 %v1387
        %1750 = vmatprep.subr.bf16.mxu0 %v1392
        %1751 = vmatpush1.bf16.msra.mxu0 %v1391
        %1752 = vmatprep.subr.bf16.mxu0 %v1396
        %1753 = vmatpush1.bf16.msra.mxu0 %v1395
        %1754 = vmatprep.subr.bf16.mxu0 %v1400
        %1755 = vmatpush1.bf16.msra.mxu0 %v1399
        %1756 = vmatprep.subr.bf16.mxu0 %v1404
        %1757 = vmatpush1.bf16.msra.mxu0 %v1403
        %1758 = vmatprep.subr.bf16.mxu0 %v1408
        %1759 = vmatpush1.bf16.msra.mxu0 %v1407
        %1760 = vmatprep.subr.bf16.mxu0 %v1412
        %1761 = vmatpush1.bf16.msra.mxu0 %v1411
        %1762 = vmatprep.subr.bf16.mxu0 %v1416
        %1763 = vmatpush1.bf16.msra.mxu0 %v1415
        %1764 = vmatprep.subr.bf16.mxu0 %v1420
        %1765 = vmatpush1.bf16.msra.mxu0 %v1419
        %1766 = vmatprep.mubr.bf16.mxu0 %v697
        %1767 = vmatmul.mubr.bf16.gmra.mrb[0].mxu0 %v696
        %v1768 = vpop.f32.mrb[0].mxu0
        %v1769 = vadd.f32 %v1726, %v1768
        %v1770 = vpop.f32.mrb[0].mxu0
        %v1771 = vadd.f32 %v1728, %v1770
        %v1772 = vpop.f32.mrb[0].mxu0
        %v1773 = vadd.f32 %v1730, %v1772
        %v1774 = vpop.f32.mrb[0].mxu0
        %v1775 = vadd.f32 %v1732, %v1774
        %1776 = vdwg.mxu0
        %1777 = vmatprep.subr.bf16.mxu0 %v1424
        %1778 = vmatpush1.bf16.msra.mxu0 %v1423
        %1779 = vmatprep.subr.bf16.mxu0 %v1428
        %1780 = vmatpush1.bf16.msra.mxu0 %v1427
        %1781 = vmatprep.subr.bf16.mxu0 %v1432
        %1782 = vmatpush1.bf16.msra.mxu0 %v1431
        %1783 = vmatprep.subr.bf16.mxu0 %v1436
        %1784 = vmatpush1.bf16.msra.mxu0 %v1435
        %1785 = vmatprep.subr.bf16.mxu0 %v1440
        %1786 = vmatpush1.bf16.msra.mxu0 %v1439
        %1787 = vmatprep.subr.bf16.mxu0 %v1444
        %1788 = vmatpush1.bf16.msra.mxu0 %v1443
        %1789 = vmatprep.subr.bf16.mxu0 %v1448
        %1790 = vmatpush1.bf16.msra.mxu0 %v1447
        %1791 = vmatprep.subr.bf16.mxu0 %v1452
        %1792 = vmatpush1.bf16.msra.mxu0 %v1451
        %1793 = vmatprep.subr.bf16.mxu0 %v1456
        %1794 = vmatpush1.bf16.msra.mxu0 %v1455
        %1795 = vmatprep.subr.bf16.mxu0 %v1460
        %1796 = vmatpush1.bf16.msra.mxu0 %v1459
        %1797 = vmatprep.subr.bf16.mxu0 %v1464
        %1798 = vmatpush1.bf16.msra.mxu0 %v1463
        %1799 = vmatprep.subr.bf16.mxu0 %v1468
        %1800 = vmatpush1.bf16.msra.mxu0 %v1467
        %1801 = vmatprep.subr.bf16.mxu0 %v1472
        %1802 = vmatpush1.bf16.msra.mxu0 %v1471
        %1803 = vmatprep.subr.bf16.mxu0 %v1476
        %1804 = vmatpush1.bf16.msra.mxu0 %v1475
        %1805 = vmatprep.subr.bf16.mxu0 %v1480
        %1806 = vmatpush1.bf16.msra.mxu0 %v1479
        %1807 = vmatprep.subr.bf16.mxu0 %v1484
        %1808 = vmatpush1.bf16.msra.mxu0 %v1483
        %1809 = vmatprep.mubr.bf16.mxu0 %v699
        %1810 = vmatmul.mubr.bf16.gmra.mrb[0].mxu0 %v698
        %v1811 = vpop.f32.mrb[0].mxu0
        %v1812 = vadd.f32 %v1769, %v1811
        %v1813 = vpop.f32.mrb[0].mxu0
        %v1814 = vadd.f32 %v1771, %v1813
        %v1815 = vpop.f32.mrb[0].mxu0
        %v1816 = vadd.f32 %v1773, %v1815
        %v1817 = vpop.f32.mrb[0].mxu0
        %v1818 = vadd.f32 %v1775, %v1817
        %1819 = vdwg.mxu0
        %1820 = vmatprep.subr.bf16.mxu0 %v1488
        %1821 = vmatpush1.bf16.msra.mxu0 %v1487
        %1822 = vmatprep.subr.bf16.mxu0 0
        %1823 = vmatpush1.bf16.msra.mxu0 0
        %1824 = vmatprep.subr.bf16.mxu0 0
        %1825 = vmatpush1.bf16.msra.mxu0 0
        %1826 = vmatprep.subr.bf16.mxu0 0
        %1827 = vmatpush1.bf16.msra.mxu0 0
        %1828 = vmatprep.subr.bf16.mxu0 0
        %1829 = vmatpush1.bf16.msra.mxu0 0
        %1830 = vmatprep.subr.bf16.mxu0 0
        %1831 = vmatpush1.bf16.msra.mxu0 0
        %1832 = vmatprep.subr.bf16.mxu0 0
        %1833 = vmatpush1.bf16.msra.mxu0 0
        %1834 = vmatprep.subr.bf16.mxu0 0
        %1835 = vmatpush1.bf16.msra.mxu0 0
        %1836 = vmatprep.subr.bf16.mxu0 0
        %1837 = vmatpush1.bf16.msra.mxu0 0
        %1838 = vmatprep.subr.bf16.mxu0 0
        %1839 = vmatpush1.bf16.msra.mxu0 0
        %1840 = vmatprep.subr.bf16.mxu0 0
        %1841 = vmatpush1.bf16.msra.mxu0 0
        %1842 = vmatprep.subr.bf16.mxu0 0
        %1843 = vmatpush1.bf16.msra.mxu0 0
        %1844 = vmatprep.subr.bf16.mxu0 0
        %1845 = vmatpush1.bf16.msra.mxu0 0
        %1846 = vmatprep.subr.bf16.mxu0 0
        %1847 = vmatpush1.bf16.msra.mxu0 0
        %1848 = vmatprep.subr.bf16.mxu0 0
        %1849 = vmatpush1.bf16.msra.mxu0 0
        %1850 = vmatprep.subr.bf16.mxu0 0
        %1851 = vmatpush1.bf16.msra.mxu0 0
        %1852 = vmatprep.mubr.bf16.mxu0 0
        %1853 = vmatmul.mubr.bf16.gmra.mrb[0].mxu0 %v1689
        %v1854 = vpop.f32.mrb[0].mxu0
        %v1855 = vadd.f32 %v1812, %v1854
        %v1856 = vpop.f32.mrb[0].mxu0
        %v1857 = vadd.f32 %v1814, %v1856
        %v1858 = vpop.f32.mrb[0].mxu0
        %v1859 = vadd.f32 %v1816, %v1858
        %v1860 = vpop.f32.mrb[0].mxu0
        %v1861 = vadd.f32 %v1818, %v1860
        %1862 = vdwg.mxu0
        %1863 = vmatprep.subr.bf16.mxu0 %v1298
        %1864 = vmatpush1.bf16.msra.mxu0 %v1297
        %1865 = vmatprep.subr.bf16.mxu0 %v1302
        %1866 = vmatpush1.bf16.msra.mxu0 %v1301
        %1867 = vmatprep.subr.bf16.mxu0 %v1306
        %1868 = vmatpush1.bf16.msra.mxu0 %v1305
        %1869 = vmatprep.subr.bf16.mxu0 %v1310
        %1870 = vmatpush1.bf16.msra.mxu0 %v1309
        %1871 = vmatprep.subr.bf16.mxu0 %v1314
        %1872 = vmatpush1.bf16.msra.mxu0 %v1313
        %1873 = vmatprep.subr.bf16.mxu0 %v1318
        %1874 = vmatpush1.bf16.msra.mxu0 %v1317
        %1875 = vmatprep.subr.bf16.mxu0 %v1322
        %1876 = vmatpush1.bf16.msra.mxu0 %v1321
        %1877 = vmatprep.subr.bf16.mxu0 %v1326
        %1878 = vmatpush1.bf16.msra.mxu0 %v1325
        %1879 = vmatprep.subr.bf16.mxu0 %v1330
        %1880 = vmatpush1.bf16.msra.mxu0 %v1329
        %1881 = vmatprep.subr.bf16.mxu0 %v1334
        %1882 = vmatpush1.bf16.msra.mxu0 %v1333
        %1883 = vmatprep.subr.bf16.mxu0 %v1338
        %1884 = vmatpush1.bf16.msra.mxu0 %v1337
        %1885 = vmatprep.subr.bf16.mxu0 %v1342
        %1886 = vmatpush1.bf16.msra.mxu0 %v1341
        %1887 = vmatprep.subr.bf16.mxu0 %v1346
        %1888 = vmatpush1.bf16.msra.mxu0 %v1345
        %1889 = vmatprep.subr.bf16.mxu0 %v1350
        %1890 = vmatpush1.bf16.msra.mxu0 %v1349
        %1891 = vmatprep.subr.bf16.mxu0 %v1354
        %1892 = vmatpush1.bf16.msra.mxu0 %v1353
        %1893 = vmatprep.subr.bf16.mxu0 %v1358
        %1894 = vmatpush1.bf16.msra.mxu0 %v1357
        %1895 = vmatprep.mubr.bf16.mxu0 %v695
        %1896 = vmatmul.mubr.bf16.gmra.mrb[0].mxu0 %v694
        %v1897 = vpop.f32.mrb[0].mxu0
        %v1898 = vadd.f32 %v663, %v1897
        %v1899 = vpop.f32.mrb[0].mxu0
        %v1900 = vadd.f32 %v667, %v1899
        %v1901 = vpop.f32.mrb[0].mxu0
        %v1902 = vadd.f32 %v663, %v1901
        %v1903 = vpop.f32.mrb[0].mxu0
        %v1904 = vadd.f32 %v667, %v1903
        %1905 = vdwg.mxu0
        %1906 = vmatprep.subr.bf16.mxu0 %v1362
        %1907 = vmatpush1.bf16.msra.mxu0 %v1361
        %1908 = vmatprep.subr.bf16.mxu0 %v1366
        %1909 = vmatpush1.bf16.msra.mxu0 %v1365
        %1910 = vmatprep.subr.bf16.mxu0 %v1370
        %1911 = vmatpush1.bf16.msra.mxu0 %v1369
        %1912 = vmatprep.subr.bf16.mxu0 %v1374
        %1913 = vmatpush1.bf16.msra.mxu0 %v1373
        %1914 = vmatprep.subr.bf16.mxu0 %v1378
        %1915 = vmatpush1.bf16.msra.mxu0 %v1377
        %1916 = vmatprep.subr.bf16.mxu0 %v1382
        %1917 = vmatpush1.bf16.msra.mxu0 %v1381
        %1918 = vmatprep.subr.bf16.mxu0 %v1386
        %1919 = vmatpush1.bf16.msra.mxu0 %v1385
        %1920 = vmatprep.subr.bf16.mxu0 %v1390
        %1921 = vmatpush1.bf16.msra.mxu0 %v1389
        %1922 = vmatprep.subr.bf16.mxu0 %v1394
        %1923 = vmatpush1.bf16.msra.mxu0 %v1393
        %1924 = vmatprep.subr.bf16.mxu0 %v1398
        %1925 = vmatpush1.bf16.msra.mxu0 %v1397
        %1926 = vmatprep.subr.bf16.mxu0 %v1402
        %1927 = vmatpush1.bf16.msra.mxu0 %v1401
        %1928 = vmatprep.subr.bf16.mxu0 %v1406
        %1929 = vmatpush1.bf16.msra.mxu0 %v1405
        %1930 = vmatprep.subr.bf16.mxu0 %v1410
        %1931 = vmatpush1.bf16.msra.mxu0 %v1409
        %1932 = vmatprep.subr.bf16.mxu0 %v1414
        %1933 = vmatpush1.bf16.msra.mxu0 %v1413
        %1934 = vmatprep.subr.bf16.mxu0 %v1418
        %1935 = vmatpush1.bf16.msra.mxu0 %v1417
        %1936 = vmatprep.subr.bf16.mxu0 %v1422
        %1937 = vmatpush1.bf16.msra.mxu0 %v1421
        %1938 = vmatprep.mubr.bf16.mxu0 %v697
        %1939 = vmatmul.mubr.bf16.gmra.mrb[0].mxu0 %v696
        %v1940 = vpop.f32.mrb[0].mxu0
        %v1941 = vadd.f32 %v1898, %v1940
        %v1942 = vpop.f32.mrb[0].mxu0
        %v1943 = vadd.f32 %v1900, %v1942
        %v1944 = vpop.f32.mrb[0].mxu0
        %v1945 = vadd.f32 %v1902, %v1944
        %v1946 = vpop.f32.mrb[0].mxu0
        %v1947 = vadd.f32 %v1904, %v1946
        %1948 = vdwg.mxu0
        %1949 = vmatprep.subr.bf16.mxu0 %v1426
        %1950 = vmatpush1.bf16.msra.mxu0 %v1425
        %1951 = vmatprep.subr.bf16.mxu0 %v1430
        %1952 = vmatpush1.bf16.msra.mxu0 %v1429
        %1953 = vmatprep.subr.bf16.mxu0 %v1434
        %1954 = vmatpush1.bf16.msra.mxu0 %v1433
        %1955 = vmatprep.subr.bf16.mxu0 %v1438
        %1956 = vmatpush1.bf16.msra.mxu0 %v1437
        %1957 = vmatprep.subr.bf16.mxu0 %v1442
        %1958 = vmatpush1.bf16.msra.mxu0 %v1441
        %1959 = vmatprep.subr.bf16.mxu0 %v1446
        %1960 = vmatpush1.bf16.msra.mxu0 %v1445
        %1961 = vmatprep.subr.bf16.mxu0 %v1450
        %1962 = vmatpush1.bf16.msra.mxu0 %v1449
        %1963 = vmatprep.subr.bf16.mxu0 %v1454
        %1964 = vmatpush1.bf16.msra.mxu0 %v1453
        %1965 = vmatprep.subr.bf16.mxu0 %v1458
        %1966 = vmatpush1.bf16.msra.mxu0 %v1457
        %1967 = vmatprep.subr.bf16.mxu0 %v1462
        %1968 = vmatpush1.bf16.msra.mxu0 %v1461
        %1969 = vmatprep.subr.bf16.mxu0 %v1466
        %1970 = vmatpush1.bf16.msra.mxu0 %v1465
        %1971 = vmatprep.subr.bf16.mxu0 %v1470
        %1972 = vmatpush1.bf16.msra.mxu0 %v1469
        %1973 = vmatprep.subr.bf16.mxu0 %v1474
        %1974 = vmatpush1.bf16.msra.mxu0 %v1473
        %1975 = vmatprep.subr.bf16.mxu0 %v1478
        %1976 = vmatpush1.bf16.msra.mxu0 %v1477
        %1977 = vmatprep.subr.bf16.mxu0 %v1482
        %1978 = vmatpush1.bf16.msra.mxu0 %v1481
        %1979 = vmatprep.subr.bf16.mxu0 %v1486
        %1980 = vmatpush1.bf16.msra.mxu0 %v1485
        %1981 = vmatprep.mubr.bf16.mxu0 %v699
        %1982 = vmatmul.mubr.bf16.gmra.mrb[0].mxu0 %v698
        %v1983 = vpop.f32.mrb[0].mxu0
        %v1984 = vadd.f32 %v1941, %v1983
        %v1985 = vpop.f32.mrb[0].mxu0
        %v1986 = vadd.f32 %v1943, %v1985
        %v1987 = vpop.f32.mrb[0].mxu0
        %v1988 = vadd.f32 %v1945, %v1987
        %v1989 = vpop.f32.mrb[0].mxu0
        %v1990 = vadd.f32 %v1947, %v1989
        %1991 = vdwg.mxu0
        %1992 = vmatprep.subr.bf16.mxu0 %v1490
        %1993 = vmatpush1.bf16.msra.mxu0 %v1489
        %1994 = vmatprep.subr.bf16.mxu0 0
        %1995 = vmatpush1.bf16.msra.mxu0 0
        %1996 = vmatprep.subr.bf16.mxu0 0
        %1997 = vmatpush1.bf16.msra.mxu0 0
        %1998 = vmatprep.subr.bf16.mxu0 0
        %1999 = vmatpush1.bf16.msra.mxu0 0
        %2000 = vmatprep.subr.bf16.mxu0 0
        %2001 = vmatpush1.bf16.msra.mxu0 0
        %2002 = vmatprep.subr.bf16.mxu0 0
        %2003 = vmatpush1.bf16.msra.mxu0 0
        %2004 = vmatprep.subr.bf16.mxu0 0
        %2005 = vmatpush1.bf16.msra.mxu0 0
        %2006 = vmatprep.subr.bf16.mxu0 0
        %2007 = vmatpush1.bf16.msra.mxu0 0
        %2008 = vmatprep.subr.bf16.mxu0 0
        %2009 = vmatpush1.bf16.msra.mxu0 0
        %2010 = vmatprep.subr.bf16.mxu0 0
        %2011 = vmatpush1.bf16.msra.mxu0 0
        %2012 = vmatprep.subr.bf16.mxu0 0
        %2013 = vmatpush1.bf16.msra.mxu0 0
        %2014 = vmatprep.subr.bf16.mxu0 0
        %2015 = vmatpush1.bf16.msra.mxu0 0
        %2016 = vmatprep.subr.bf16.mxu0 0
        %2017 = vmatpush1.bf16.msra.mxu0 0
        %2018 = vmatprep.subr.bf16.mxu0 0
        %2019 = vmatpush1.bf16.msra.mxu0 0
        %2020 = vmatprep.subr.bf16.mxu0 0
        %2021 = vmatpush1.bf16.msra.mxu0 0
        %2022 = vmatprep.subr.bf16.mxu0 0
        %2023 = vmatpush1.bf16.msra.mxu0 0
        %2024 = vmatprep.mubr.bf16.mxu0 0
        %2025 = vmatmul.mubr.bf16.gmra.mrb[0].mxu0 %v1689
        %v2026 = vpop.f32.mrb[0].mxu0
        %v2027 = vadd.f32 %v1984, %v2026
        %v2028 = vpop.f32.mrb[0].mxu0
        %v2029 = vadd.f32 %v1986, %v2028
        %v2030 = vpop.f32.mrb[0].mxu0
        %v2031 = vadd.f32 %v1988, %v2030
        %v2032 = vpop.f32.mrb[0].mxu0
        %v2033 = vadd.f32 %v1990, %v2032
        %2034 = vdwg.mxu0
        %v2035 = vmax.f32 %v1855, 0.0
        %v2036 = vmax.f32 %v1857, 0.0
        %v2037 = vmax.f32 %v2027, 0.0
        %v2038 = vmax.f32 %v2029, 0.0
        %v2039 = vmax.f32 %v1859, 0.0
        %v2040 = vmax.f32 %v1861, 0.0
        %v2041 = vmax.f32 %v2031, 0.0
        %v2042 = vmax.f32 %v2033, 0.0
        %v2043 = vpack.c.bf16 %v2039, %v2035
        %v2044 = vpack.c.bf16 %v2040, %v2036
        %v2045 = vpack.c.bf16 %v2041, %v2037
        %v2046 = vpack.c.bf16 %v2042, %v2038
        %v2047 = vld [vmem:[%s3] sm:$0xff]
        %v2048 = vld [vmem:[%s3 + $0x8] sm:$0xff]
        %v2049 = vld [vmem:[%s3 + $0x10] sm:$0xff]
        %v2050 = vld [vmem:[%s3 + $0x18] sm:$0xff]
        %v2051 = vld [vmem:[%s3 + $0x20] sm:$0xff]
        %v2052 = vld [vmem:[%s3 + $0x28] sm:$0xff]
        %v2053 = vld [vmem:[%s3 + $0x30] sm:$0xff]
        %v2054 = vld [vmem:[%s3 + $0x38] sm:$0xff]
        %v2055 = vld [vmem:[%s3 + $0x40] sm:$0xff]
        %v2056 = vld [vmem:[%s3 + $0x48] sm:$0xff]
        %v2057 = vld [vmem:[%s3 + $0x50] sm:$0xff]
        %v2058 = vld [vmem:[%s3 + $0x58] sm:$0xff]
        %v2059 = vld [vmem:[%s3 + $0x60] sm:$0xff]
        %v2060 = vld [vmem:[%s3 + $0x68] sm:$0xff]
        %v2061 = vld [vmem:[%s3 + $0x70] sm:$0xff]
        %v2062 = vld [vmem:[%s3 + $0x78] sm:$0xff]
        %v2063 = vld [vmem:[%s3 + $0x80] sm:$0xff]
        %v2064 = vld [vmem:[%s3 + $0x88] sm:$0xff]
        %v2065 = vld [vmem:[%s3 + $0x90] sm:$0xff]
        %v2066 = vld [vmem:[%s3 + $0x98] sm:$0xff]
        %v2067 = vld [vmem:[%s3 + $0xa0] sm:$0xff]
        %v2068 = vld [vmem:[%s3 + $0xa8] sm:$0xff]
        %v2069 = vld [vmem:[%s3 + $0xb0] sm:$0xff]
        %v2070 = vld [vmem:[%s3 + $0xb8] sm:$0xff]
        %v2071 = vld [vmem:[%s3 + $0xc0] sm:$0xff]
        %v2072 = vld [vmem:[%s3 + $0xc8] sm:$0xff]
        %v2073 = vld [vmem:[%s3 + $0xd0] sm:$0xff]
        %v2074 = vld [vmem:[%s3 + $0xd8] sm:$0xff]
        %v2075 = vld [vmem:[%s3 + $0xe0] sm:$0xff]
        %v2076 = vld [vmem:[%s3 + $0xe8] sm:$0xff]
        %v2077 = vld [vmem:[%s3 + $0xf0] sm:$0xff]
        %v2078 = vld [vmem:[%s3 + $0xf8] sm:$0xff]
        %v2079 = vld [vmem:[%s3 + $0x100] sm:$0xff]
        %v2080 = vld [vmem:[%s3 + $0x108] sm:$0xff]
        %v2081 = vld [vmem:[%s3 + $0x110] sm:$0xff]
        %v2082 = vld [vmem:[%s3 + $0x118] sm:$0xff]
        %v2083 = vld [vmem:[%s3 + $0x120] sm:$0xff]
        %v2084 = vld [vmem:[%s3 + $0x128] sm:$0xff]
        %v2085 = vld [vmem:[%s3 + $0x130] sm:$0xff]
        %v2086 = vld [vmem:[%s3 + $0x138] sm:$0xff]
        %v2087 = vld [vmem:[%s3 + $0x140] sm:$0xff]
        %v2088 = vld [vmem:[%s3 + $0x148] sm:$0xff]
        %v2089 = vld [vmem:[%s3 + $0x150] sm:$0xff]
        %v2090 = vld [vmem:[%s3 + $0x158] sm:$0xff]
        %v2091 = vld [vmem:[%s3 + $0x160] sm:$0xff]
        %v2092 = vld [vmem:[%s3 + $0x168] sm:$0xff]
        %v2093 = vld [vmem:[%s3 + $0x170] sm:$0xff]
        %v2094 = vld [vmem:[%s3 + $0x178] sm:$0xff]
        %v2095 = vld [vmem:[%s3 + $0x180] sm:$0xff]
        %v2096 = vld [vmem:[%s4] sm:$0x3]
        %v2098 = vlaneseq
        %v2099 = vshrl.u32 %v2098, 7
        %v2100 = vsub.s32 0, %v2099
        %v2101 = vrot.slane %v2096, %v2100
        %v2102 = vlaneseq
        %v2103 = vshrl.u32 %v2102, 7
        %v2104 = vsub.s32 1, %v2103
        %v2105 = vrot.slane %v2096, %v2104
        %v2157 = vunpack.c.l.b16 %v2047
        %v2158 = vunpack.c.h.b16 %v2047
        %v2159 = vunpack.c.l.b16 %v2048
        %v2160 = vunpack.c.h.b16 %v2048
        %v2161 = vunpack.c.l.b16 %v2049
        %v2162 = vunpack.c.h.b16 %v2049
        %v2163 = vunpack.c.l.b16 %v2050
        %v2164 = vunpack.c.h.b16 %v2050
        %v2165 = vunpack.c.l.b16 %v2051
        %v2166 = vunpack.c.h.b16 %v2051
        %v2167 = vunpack.c.l.b16 %v2052
        %v2168 = vunpack.c.h.b16 %v2052
        %v2169 = vunpack.c.l.b16 %v2053
        %v2170 = vunpack.c.h.b16 %v2053
        %v2171 = vunpack.c.l.b16 %v2054
        %v2172 = vunpack.c.h.b16 %v2054
        %v2173 = vunpack.c.l.b16 %v2055
        %v2174 = vunpack.c.h.b16 %v2055
        %v2175 = vunpack.c.l.b16 %v2056
        %v2176 = vunpack.c.h.b16 %v2056
        %v2177 = vunpack.c.l.b16 %v2057
        %v2178 = vunpack.c.h.b16 %v2057
        %v2179 = vunpack.c.l.b16 %v2058
        %v2180 = vunpack.c.h.b16 %v2058
        %v2181 = vunpack.c.l.b16 %v2059
        %v2182 = vunpack.c.h.b16 %v2059
        %v2183 = vunpack.c.l.b16 %v2060
        %v2184 = vunpack.c.h.b16 %v2060
        %v2185 = vunpack.c.l.b16 %v2061
        %v2186 = vunpack.c.h.b16 %v2061
        %v2187 = vunpack.c.l.b16 %v2062
        %v2188 = vunpack.c.h.b16 %v2062
        %v2189 = vunpack.c.l.b16 %v2063
        %v2190 = vunpack.c.h.b16 %v2063
        %v2191 = vunpack.c.l.b16 %v2064
        %v2192 = vunpack.c.h.b16 %v2064
        %v2193 = vunpack.c.l.b16 %v2065
        %v2194 = vunpack.c.h.b16 %v2065
        %v2195 = vunpack.c.l.b16 %v2066
        %v2196 = vunpack.c.h.b16 %v2066
        %v2197 = vunpack.c.l.b16 %v2067
        %v2198 = vunpack.c.h.b16 %v2067
        %v2199 = vunpack.c.l.b16 %v2068
        %v2200 = vunpack.c.h.b16 %v2068
        %v2201 = vunpack.c.l.b16 %v2069
        %v2202 = vunpack.c.h.b16 %v2069
        %v2203 = vunpack.c.l.b16 %v2070
        %v2204 = vunpack.c.h.b16 %v2070
        %v2205 = vunpack.c.l.b16 %v2071
        %v2206 = vunpack.c.h.b16 %v2071
        %v2207 = vunpack.c.l.b16 %v2072
        %v2208 = vunpack.c.h.b16 %v2072
        %v2209 = vunpack.c.l.b16 %v2073
        %v2210 = vunpack.c.h.b16 %v2073
        %v2211 = vunpack.c.l.b16 %v2074
        %v2212 = vunpack.c.h.b16 %v2074
        %v2213 = vunpack.c.l.b16 %v2075
        %v2214 = vunpack.c.h.b16 %v2075
        %v2215 = vunpack.c.l.b16 %v2076
        %v2216 = vunpack.c.h.b16 %v2076
        %v2217 = vunpack.c.l.b16 %v2077
        %v2218 = vunpack.c.h.b16 %v2077
        %v2219 = vunpack.c.l.b16 %v2078
        %v2220 = vunpack.c.h.b16 %v2078
        %v2221 = vunpack.c.l.b16 %v2079
        %v2222 = vunpack.c.h.b16 %v2079
        %v2223 = vunpack.c.l.b16 %v2080
        %v2224 = vunpack.c.h.b16 %v2080
        %v2225 = vunpack.c.l.b16 %v2081
        %v2226 = vunpack.c.h.b16 %v2081
        %v2227 = vunpack.c.l.b16 %v2082
        %v2228 = vunpack.c.h.b16 %v2082
        %v2229 = vunpack.c.l.b16 %v2083
        %v2230 = vunpack.c.h.b16 %v2083
        %v2231 = vunpack.c.l.b16 %v2084
        %v2232 = vunpack.c.h.b16 %v2084
        %v2233 = vunpack.c.l.b16 %v2085
        %v2234 = vunpack.c.h.b16 %v2085
        %v2235 = vunpack.c.l.b16 %v2086
        %v2236 = vunpack.c.h.b16 %v2086
        %v2237 = vunpack.c.l.b16 %v2087
        %v2238 = vunpack.c.h.b16 %v2087
        %v2239 = vunpack.c.l.b16 %v2088
        %v2240 = vunpack.c.h.b16 %v2088
        %v2241 = vunpack.c.l.b16 %v2089
        %v2242 = vunpack.c.h.b16 %v2089
        %v2243 = vunpack.c.l.b16 %v2090
        %v2244 = vunpack.c.h.b16 %v2090
        %v2245 = vunpack.c.l.b16 %v2091
        %v2246 = vunpack.c.h.b16 %v2091
        %v2247 = vunpack.c.l.b16 %v2092
        %v2248 = vunpack.c.h.b16 %v2092
        %v2249 = vunpack.c.l.b16 %v2093
        %v2250 = vunpack.c.h.b16 %v2093
        %v2251 = vunpack.c.l.b16 %v2094
        %v2252 = vunpack.c.h.b16 %v2094
        %v2253 = vunpack.c.l.b16 %v2095
        %v2254 = vunpack.c.h.b16 %v2095
        %v2255 = vpack.c.b16 %v2159, %v2157
        %v2256 = vpack.c.b16 %v2160, %v2158
        %v2257 = vpack.c.b16 %v2163, %v2161
        %v2258 = vpack.c.b16 %v2164, %v2162
        %v2259 = vpack.c.b16 %v2167, %v2165
        %v2260 = vpack.c.b16 %v2168, %v2166
        %v2261 = vpack.c.b16 %v2171, %v2169
        %v2262 = vpack.c.b16 %v2172, %v2170
        %v2263 = vpack.c.b16 %v2175, %v2173
        %v2264 = vpack.c.b16 %v2176, %v2174
        %v2265 = vpack.c.b16 %v2179, %v2177
        %v2266 = vpack.c.b16 %v2180, %v2178
        %v2267 = vpack.c.b16 %v2183, %v2181
        %v2268 = vpack.c.b16 %v2184, %v2182
        %v2269 = vpack.c.b16 %v2187, %v2185
        %v2270 = vpack.c.b16 %v2188, %v2186
        %v2271 = vpack.c.b16 %v2191, %v2189
        %v2272 = vpack.c.b16 %v2192, %v2190
        %v2273 = vpack.c.b16 %v2195, %v2193
        %v2274 = vpack.c.b16 %v2196, %v2194
        %v2275 = vpack.c.b16 %v2199, %v2197
        %v2276 = vpack.c.b16 %v2200, %v2198
        %v2277 = vpack.c.b16 %v2203, %v2201
        %v2278 = vpack.c.b16 %v2204, %v2202
        %v2279 = vpack.c.b16 %v2207, %v2205
        %v2280 = vpack.c.b16 %v2208, %v2206
        %v2281 = vpack.c.b16 %v2211, %v2209
        %v2282 = vpack.c.b16 %v2212, %v2210
        %v2283 = vpack.c.b16 %v2215, %v2213
        %v2284 = vpack.c.b16 %v2216, %v2214
        %v2285 = vpack.c.b16 %v2219, %v2217
        %v2286 = vpack.c.b16 %v2220, %v2218
        %v2287 = vpack.c.b16 %v2223, %v2221
        %v2288 = vpack.c.b16 %v2224, %v2222
        %v2289 = vpack.c.b16 %v2227, %v2225
        %v2290 = vpack.c.b16 %v2228, %v2226
        %v2291 = vpack.c.b16 %v2231, %v2229
        %v2292 = vpack.c.b16 %v2232, %v2230
        %v2293 = vpack.c.b16 %v2235, %v2233
        %v2294 = vpack.c.b16 %v2236, %v2234
        %v2295 = vpack.c.b16 %v2239, %v2237
        %v2296 = vpack.c.b16 %v2240, %v2238
        %v2297 = vpack.c.b16 %v2243, %v2241
        %v2298 = vpack.c.b16 %v2244, %v2242
        %v2299 = vpack.c.b16 %v2247, %v2245
        %v2300 = vpack.c.b16 %v2248, %v2246
        %v2301 = vpack.c.b16 %v2251, %v2249
        %v2302 = vpack.c.b16 %v2252, %v2250
        %v2303 = vpack.c.b16 %v2253, %v2253
        %v2304 = vpack.c.b16 %v2254, %v2254
        %vm2353 = vcmask 64512
        %v2355 = vsel %vm2353, %v2046, 0
        %vm2357 = vcmask 1043456
        %v2359 = vsel %vm2357, %v2303, 0
        %v2362 = vsel %vm2357, %v2304, 0
        %2364 = vmatprep.subr.bf16.mxu0 %v2256
        %2365 = vmatpush1.bf16.msra.mxu0 %v2255
        %2366 = vmatprep.subr.bf16.mxu0 %v2258
        %2367 = vmatpush1.bf16.msra.mxu0 %v2257
        %2368 = vmatprep.subr.bf16.mxu0 %v2260
        %2369 = vmatpush1.bf16.msra.mxu0 %v2259
        %2370 = vmatprep.subr.bf16.mxu0 %v2262
        %2371 = vmatpush1.bf16.msra.mxu0 %v2261
        %2372 = vmatprep.subr.bf16.mxu0 %v2264
        %2373 = vmatpush1.bf16.msra.mxu0 %v2263
        %2374 = vmatprep.subr.bf16.mxu0 %v2266
        %2375 = vmatpush1.bf16.msra.mxu0 %v2265
        %2376 = vmatprep.subr.bf16.mxu0 %v2268
        %2377 = vmatpush1.bf16.msra.mxu0 %v2267
        %2378 = vmatprep.subr.bf16.mxu0 %v2270
        %2379 = vmatpush1.bf16.msra.mxu0 %v2269
        %2380 = vmatprep.subr.bf16.mxu0 %v2272
        %2381 = vmatpush1.bf16.msra.mxu0 %v2271
        %2382 = vmatprep.subr.bf16.mxu0 %v2274
        %2383 = vmatpush1.bf16.msra.mxu0 %v2273
        %2384 = vmatprep.subr.bf16.mxu0 %v2276
        %2385 = vmatpush1.bf16.msra.mxu0 %v2275
        %2386 = vmatprep.subr.bf16.mxu0 %v2278
        %2387 = vmatpush1.bf16.msra.mxu0 %v2277
        %2388 = vmatprep.subr.bf16.mxu0 %v2280
        %2389 = vmatpush1.bf16.msra.mxu0 %v2279
        %2390 = vmatprep.subr.bf16.mxu0 %v2282
        %2391 = vmatpush1.bf16.msra.mxu0 %v2281
        %2392 = vmatprep.subr.bf16.mxu0 %v2284
        %2393 = vmatpush1.bf16.msra.mxu0 %v2283
        %2394 = vmatprep.subr.bf16.mxu0 %v2286
        %2395 = vmatpush1.bf16.msra.mxu0 %v2285
        %2396 = vmatprep.mubr.bf16.mxu0 %v2044
        %2397 = vmatmul.mubr.bf16.gmra.mrb[0].mxu0 %v2043
        %v2398 = vpop.f32.mrb[0].mxu0
        %v2399 = vadd.f32 %v2101, %v2398
        %v2400 = vpop.f32.mrb[0].mxu0
        %v2401 = vadd.f32 %v2105, %v2400
        %v2402 = vpop.f32.mrb[0].mxu0
        %v2403 = vadd.f32 %v2101, %v2402
        %v2404 = vpop.f32.mrb[0].mxu0
        %v2405 = vadd.f32 %v2105, %v2404
        %2406 = vdwg.mxu0
        %2407 = vmatprep.subr.bf16.mxu0 %v2288
        %2408 = vmatpush1.bf16.msra.mxu0 %v2287
        %2409 = vmatprep.subr.bf16.mxu0 %v2290
        %2410 = vmatpush1.bf16.msra.mxu0 %v2289
        %2411 = vmatprep.subr.bf16.mxu0 %v2292
        %2412 = vmatpush1.bf16.msra.mxu0 %v2291
        %2413 = vmatprep.subr.bf16.mxu0 %v2294
        %2414 = vmatpush1.bf16.msra.mxu0 %v2293
        %2415 = vmatprep.subr.bf16.mxu0 %v2296
        %2416 = vmatpush1.bf16.msra.mxu0 %v2295
        %2417 = vmatprep.subr.bf16.mxu0 %v2298
        %2418 = vmatpush1.bf16.msra.mxu0 %v2297
        %2419 = vmatprep.subr.bf16.mxu0 %v2300
        %2420 = vmatpush1.bf16.msra.mxu0 %v2299
        %2421 = vmatprep.subr.bf16.mxu0 %v2302
        %2422 = vmatpush1.bf16.msra.mxu0 %v2301
        %2423 = vmatprep.subr.bf16.mxu0 %v2362
        %2424 = vmatpush1.bf16.msra.mxu0 %v2359
        %2425 = vmatprep.subr.bf16.mxu0 0
        %2426 = vmatpush1.bf16.msra.mxu0 0
        %2427 = vmatprep.subr.bf16.mxu0 0
        %2428 = vmatpush1.bf16.msra.mxu0 0
        %2429 = vmatprep.subr.bf16.mxu0 0
        %2430 = vmatpush1.bf16.msra.mxu0 0
        %2431 = vmatprep.subr.bf16.mxu0 0
        %2432 = vmatpush1.bf16.msra.mxu0 0
        %2433 = vmatprep.subr.bf16.mxu0 0
        %2434 = vmatpush1.bf16.msra.mxu0 0
        %2435 = vmatprep.subr.bf16.mxu0 0
        %2436 = vmatpush1.bf16.msra.mxu0 0
        %2437 = vmatprep.subr.bf16.mxu0 0
        %2438 = vmatpush1.bf16.msra.mxu0 0
        %2439 = vmatprep.mubr.bf16.mxu0 %v2355
        %2440 = vmatmul.mubr.bf16.gmra.mrb[0].mxu0 %v2045
        %v2441 = vpop.f32.mrb[0].mxu0
        %v2442 = vadd.f32 %v2399, %v2441
        %v2443 = vpop.f32.mrb[0].mxu0
        %v2444 = vadd.f32 %v2401, %v2443
        %v2445 = vpop.f32.mrb[0].mxu0
        %v2446 = vadd.f32 %v2403, %v2445
        %v2447 = vpop.f32.mrb[0].mxu0
        %v2448 = vadd.f32 %v2405, %v2447
        %2449 = vdwg.mxu0
        %v2450 = vmax.f32 %v2442, 0.0
        %v2451 = vmax.f32 %v2444, 0.0
        %v2452 = vmax.f32 %v2446, 0.0
        %v2453 = vmax.f32 %v2448, 0.0
        %v2454 = vpack.c.bf16 %v2452, %v2450
        %v2455 = vpack.c.bf16 %v2453, %v2451
        %v2456 = vld [vmem:[%s5] sm:$0xf]
        %v2457 = vld [vmem:[%s5 + $0x4] sm:$0xf]
        %v2458 = vld [vmem:[%s5 + $0x8] sm:$0xf]
        %v2459 = vld [vmem:[%s5 + $0xc] sm:$0xf]
        %v2460 = vld [vmem:[%s5 + $0x10] sm:$0xf]
        %v2461 = vld [vmem:[%s5 + $0x14] sm:$0xf]
        %v2462 = vld [vmem:[%s5 + $0x18] sm:$0xf]
        %v2463 = vld [vmem:[%s5 + $0x1c] sm:$0xf]
        %v2464 = vld [vmem:[%s5 + $0x20] sm:$0xf]
        %v2465 = vld [vmem:[%s5 + $0x24] sm:$0xf]
        %v2466 = vld [vmem:[%s5 + $0x28] sm:$0xf]
        %v2467 = vld [vmem:[%s5 + $0x2c] sm:$0xf]
        %v2468 = vld [vmem:[%s5 + $0x30] sm:$0xf]
        %v2469 = vld [vmem:[%s5 + $0x34] sm:$0xf]
        %v2470 = vld [vmem:[%s5 + $0x38] sm:$0xf]
        %v2471 = vld [vmem:[%s5 + $0x3c] sm:$0xf]
        %v2472 = vld [vmem:[%s5 + $0x40] sm:$0xf]
        %v2473 = vld [vmem:[%s5 + $0x44] sm:$0xf]
        %v2474 = vld [vmem:[%s5 + $0x48] sm:$0xf]
        %v2475 = vld [vmem:[%s5 + $0x4c] sm:$0xf]
        %v2476 = vld [vmem:[%s5 + $0x50] sm:$0xf]
        %v2477 = vld [vmem:[%s5 + $0x54] sm:$0xf]
        %v2478 = vld [vmem:[%s5 + $0x58] sm:$0xf]
        %v2479 = vld [vmem:[%s5 + $0x5c] sm:$0xf]
        %v2480 = vld [vmem:[%s5 + $0x60] sm:$0x3]
        %v2481 = vld [vmem:[%s6] sm:$0x1]
        %v2483 = vlaneseq
        %v2484 = vshrl.u32 %v2483, 7
        %v2485 = vsub.s32 0, %v2484
        %v2486 = vrot.slane %v2481, %v2485
        %v2513 = vunpack.c.l.b16 %v2456
        %v2514 = vunpack.c.l.b16 %v2457
        %v2515 = vunpack.c.l.b16 %v2458
        %v2516 = vunpack.c.l.b16 %v2459
        %v2517 = vunpack.c.l.b16 %v2460
        %v2518 = vunpack.c.l.b16 %v2461
        %v2519 = vunpack.c.l.b16 %v2462
        %v2520 = vunpack.c.l.b16 %v2463
        %v2521 = vunpack.c.l.b16 %v2464
        %v2522 = vunpack.c.l.b16 %v2465
        %v2523 = vunpack.c.l.b16 %v2466
        %v2524 = vunpack.c.l.b16 %v2467
        %v2525 = vunpack.c.l.b16 %v2468
        %v2526 = vunpack.c.l.b16 %v2469
        %v2527 = vunpack.c.l.b16 %v2470
        %v2528 = vunpack.c.l.b16 %v2471
        %v2529 = vunpack.c.l.b16 %v2472
        %v2530 = vunpack.c.l.b16 %v2473
        %v2531 = vunpack.c.l.b16 %v2474
        %v2532 = vunpack.c.l.b16 %v2475
        %v2533 = vunpack.c.l.b16 %v2476
        %v2534 = vunpack.c.l.b16 %v2477
        %v2535 = vunpack.c.l.b16 %v2478
        %v2536 = vunpack.c.l.b16 %v2479
        %v2537 = vunpack.c.l.b16 %v2480
        %v2538 = vpack.c.b16 %v2514, %v2513
        %v2539 = vpack.c.b16 %v2516, %v2515
        %v2540 = vpack.c.b16 %v2518, %v2517
        %v2541 = vpack.c.b16 %v2520, %v2519
        %v2542 = vpack.c.b16 %v2522, %v2521
        %v2543 = vpack.c.b16 %v2524, %v2523
        %v2544 = vpack.c.b16 %v2526, %v2525
        %v2545 = vpack.c.b16 %v2528, %v2527
        %v2546 = vpack.c.b16 %v2530, %v2529
        %v2547 = vpack.c.b16 %v2532, %v2531
        %v2548 = vpack.c.b16 %v2534, %v2533
        %v2549 = vpack.c.b16 %v2536, %v2535
        %v2550 = vpack.c.b16 %v2537, %v2537
        %vm2563 = vcmask 556032
        %v2565 = vsel %vm2563, %v2455, 0
        %vm2567 = vcmask 1041408
        %v2569 = vsel %vm2567, %v2550, 0
        %2571 = vmatprep.subr.bf16.mxu0 0
        %2572 = vmatpush1.bf16.msra.mxu0 %v2538
        %2573 = vmatprep.subr.bf16.mxu0 0
        %2574 = vmatpush1.bf16.msra.mxu0 %v2539
        %2575 = vmatprep.subr.bf16.mxu0 0
        %2576 = vmatpush1.bf16.msra.mxu0 %v2540
        %2577 = vmatprep.subr.bf16.mxu0 0
        %2578 = vmatpush1.bf16.msra.mxu0 %v2541
        %2579 = vmatprep.subr.bf16.mxu0 0
        %2580 = vmatpush1.bf16.msra.mxu0 %v2542
        %2581 = vmatprep.subr.bf16.mxu0 0
        %2582 = vmatpush1.bf16.msra.mxu0 %v2543
        %2583 = vmatprep.subr.bf16.mxu0 0
        %2584 = vmatpush1.bf16.msra.mxu0 %v2544
        %2585 = vmatprep.subr.bf16.mxu0 0
        %2586 = vmatpush1.bf16.msra.mxu0 %v2545
        %2587 = vmatprep.subr.bf16.mxu0 0
        %2588 = vmatpush1.bf16.msra.mxu0 %v2546
        %2589 = vmatprep.subr.bf16.mxu0 0
        %2590 = vmatpush1.bf16.msra.mxu0 %v2547
        %2591 = vmatprep.subr.bf16.mxu0 0
        %2592 = vmatpush1.bf16.msra.mxu0 %v2548
        %2593 = vmatprep.subr.bf16.mxu0 0
        %2594 = vmatpush1.bf16.msra.mxu0 %v2549
        %2595 = vmatprep.subr.bf16.mxu0 0
        %2596 = vmatpush1.bf16.msra.mxu0 %v2569
        %2597 = vmatprep.subr.bf16.mxu0 0
        %2598 = vmatpush1.bf16.msra.mxu0 0
        %2599 = vmatprep.subr.bf16.mxu0 0
        %2600 = vmatpush1.bf16.msra.mxu0 0
        %2601 = vmatprep.subr.bf16.mxu0 0
        %2602 = vmatpush1.bf16.msra.mxu0 0
        %2603 = vmatprep.mubr.bf16.mxu0 %v2565
        %2604 = vmatmul.mubr.bf16.gmra.mrb[0].mxu0 %v2454
        %v2605 = vpop.f32.mrb[0].mxu0
        %v2606 = vadd.f32 %v2486, %v2605
        %v2607 = vpop.f32.mrb[0].mxu0
        %v2608 = vpop.f32.mrb[0].mxu0
        %v2609 = vadd.f32 %v2486, %v2608
        %v2610 = vpop.f32.mrb[0].mxu0
        %2611 = vdwg.mxu0
        %v2612 = vmax.f32 %v2606, 0.0
        %v2613 = vmax.f32 %v2609, 0.0
        %v2614 = vpack.c.bf16 %v2613, %v2612
        %v2615 = vld [vmem:[%s7] sm:$0xf]
        %v2616 = vld [vmem:[%s7 + $0x4] sm:$0xf]
        %v2617 = vld [vmem:[%s7 + $0x8] sm:$0xf]
        %v2618 = vld [vmem:[%s7 + $0xc] sm:$0xf]
        %v2619 = vld [vmem:[%s7 + $0x10] sm:$0xf]
        %v2620 = vld [vmem:[%s7 + $0x14] sm:$0xf]
        %v2621 = vld [vmem:[%s7 + $0x18] sm:$0xf]
        %v2622 = vld [vmem:[%s7 + $0x1c] sm:$0xf]
        %v2623 = vld [vmem:[%s7 + $0x20] sm:$0xf]
        %v2624 = vld [vmem:[%s7 + $0x24] sm:$0xf]
        %v2625 = vld [vmem:[%s7 + $0x28] sm:$0xf]
        %v2626 = vld [vmem:[%s7 + $0x2c] sm:$0xf]
        %v2627 = vld [vmem:[%s7 + $0x30] sm:$0x1]
        %v2628 = vld [vmem:[%s8] sm:$0x1]
        %v2630 = vlaneseq
        %v2631 = vshrl.u32 %v2630, 7
        %v2632 = vsub.s32 0, %v2631
        %v2633 = vrot.slane %v2628, %v2632
        %v2648 = vunpack.c.l.b16 %v2615
        %v2649 = vunpack.c.l.b16 %v2616
        %v2650 = vunpack.c.l.b16 %v2617
        %v2651 = vunpack.c.l.b16 %v2618
        %v2652 = vunpack.c.l.b16 %v2619
        %v2653 = vunpack.c.l.b16 %v2620
        %v2654 = vunpack.c.l.b16 %v2621
        %v2655 = vunpack.c.l.b16 %v2622
        %v2656 = vunpack.c.l.b16 %v2623
        %v2657 = vunpack.c.l.b16 %v2624
        %v2658 = vunpack.c.l.b16 %v2625
        %v2659 = vunpack.c.l.b16 %v2626
        %v2660 = vunpack.c.l.b16 %v2627
        %v2661 = vpack.c.b16 %v2649, %v2648
        %v2662 = vpack.c.b16 %v2651, %v2650
        %v2663 = vpack.c.b16 %v2653, %v2652
        %v2664 = vpack.c.b16 %v2655, %v2654
        %v2665 = vpack.c.b16 %v2657, %v2656
        %v2666 = vpack.c.b16 %v2659, %v2658
        %v2667 = vpack.c.b16 %v2660, %v2660
        %vm2674 = vcmask 801792
        %v2676 = vsel %vm2674, %v2614, 0
        %vm2678 = vcmask 1040384
        %v2680 = vsel %vm2678, %v2667, 0
        %2682 = vmatprep.subr.bf16.mxu0 0
        %2683 = vmatpush1.bf16.msra.mxu0 %v2661
        %2684 = vmatprep.subr.bf16.mxu0 0
        %2685 = vmatpush1.bf16.msra.mxu0 %v2662
        %2686 = vmatprep.subr.bf16.mxu0 0
        %2687 = vmatpush1.bf16.msra.mxu0 %v2663
        %2688 = vmatprep.subr.bf16.mxu0 0
        %2689 = vmatpush1.bf16.msra.mxu0 %v2664
        %2690 = vmatprep.subr.bf16.mxu0 0
        %2691 = vmatpush1.bf16.msra.mxu0 %v2665
        %2692 = vmatprep.subr.bf16.mxu0 0
        %2693 = vmatpush1.bf16.msra.mxu0 %v2666
        %2694 = vmatprep.subr.bf16.mxu0 0
        %2695 = vmatpush1.bf16.msra.mxu0 %v2680
        %2696 = vmatprep.subr.bf16.mxu0 0
        %2697 = vmatpush1.bf16.msra.mxu0 0
        %2698 = vmatprep.subr.bf16.mxu0 0
        %2699 = vmatpush1.bf16.msra.mxu0 0
        %2700 = vmatprep.subr.bf16.mxu0 0
        %2701 = vmatpush1.bf16.msra.mxu0 0
        %2702 = vmatprep.subr.bf16.mxu0 0
        %2703 = vmatpush1.bf16.msra.mxu0 0
        %2704 = vmatprep.subr.bf16.mxu0 0
        %2705 = vmatpush1.bf16.msra.mxu0 0
        %2706 = vmatprep.subr.bf16.mxu0 0
        %2707 = vmatpush1.bf16.msra.mxu0 0
        %2708 = vmatprep.subr.bf16.mxu0 0
        %2709 = vmatpush1.bf16.msra.mxu0 0
        %2710 = vmatprep.subr.bf16.mxu0 0
        %2711 = vmatpush1.bf16.msra.mxu0 0
        %2712 = vmatprep.subr.bf16.mxu0 0
        %2713 = vmatpush1.bf16.msra.mxu0 0
        %2714 = vmatprep.mubr.bf16.mxu0 0
        %2715 = vmatmul.mubr.bf16.gmra.mrb[0].mxu0 %v2676
        %v2716 = vpop.f32.mrb[0].mxu0
        %v2717 = vadd.f32 %v2633, %v2716
        %v2718 = vpop.f32.mrb[0].mxu0
        %v2719 = vpop.f32.mrb[0].mxu0
        %v2720 = vadd.f32 %v2633, %v2719
        %v2721 = vpop.f32.mrb[0].mxu0
        %2722 = vdwg.mxu0
        %v2723 = vmax.f32 %v2717, 0.0
        %v2724 = vmax.f32 %v2720, 0.0
        %v2725 = vpack.c.bf16 %v2724, %v2723
        %v2726 = vld [vmem:[%s9] sm:$0xf]
        %v2727 = vld [vmem:[%s9 + $0x4] sm:$0xf]
        %v2728 = vld [vmem:[%s9 + $0x8] sm:$0xf]
        %v2729 = vld [vmem:[%s9 + $0xc] sm:$0xf]
        %v2730 = vld [vmem:[%s9 + $0x10] sm:$0xf]
        %v2731 = vld [vmem:[%s9 + $0x14] sm:$0xf]
        %v2732 = vld [vmem:[%s10] sm:$0x1]
        %v2734 = vlaneseq
        %v2735 = vshrl.u32 %v2734, 7
        %v2736 = vsub.s32 0, %v2735
        %v2737 = vrot.slane %v2732, %v2736
        %v2745 = vunpack.c.l.b16 %v2726
        %v2746 = vunpack.c.l.b16 %v2727
        %v2747 = vunpack.c.l.b16 %v2728
        %v2748 = vunpack.c.l.b16 %v2729
        %v2749 = vunpack.c.l.b16 %v2730
        %v2750 = vunpack.c.l.b16 %v2731
        %v2751 = vpack.c.b16 %v2746, %v2745
        %v2752 = vpack.c.b16 %v2748, %v2747
        %v2753 = vpack.c.b16 %v2750, %v2749
        %vm2757 = vcmask 392192
        %v2759 = vsel %vm2757, %v2725, 0
        %2761 = vmatprep.subr.bf16.mxu0 0
        %2762 = vmatpush1.bf16.msra.mxu0 %v2751
        %2763 = vmatprep.subr.bf16.mxu0 0
        %2764 = vmatpush1.bf16.msra.mxu0 %v2752
        %2765 = vmatprep.subr.bf16.mxu0 0
        %2766 = vmatpush1.bf16.msra.mxu0 %v2753
        %2767 = vmatprep.subr.bf16.mxu0 0
        %2768 = vmatpush1.bf16.msra.mxu0 0
        %2769 = vmatprep.subr.bf16.mxu0 0
        %2770 = vmatpush1.bf16.msra.mxu0 0
        %2771 = vmatprep.subr.bf16.mxu0 0
        %2772 = vmatpush1.bf16.msra.mxu0 0
        %2773 = vmatprep.subr.bf16.mxu0 0
        %2774 = vmatpush1.bf16.msra.mxu0 0
        %2775 = vmatprep.subr.bf16.mxu0 0
        %2776 = vmatpush1.bf16.msra.mxu0 0
        %2777 = vmatprep.subr.bf16.mxu0 0
        %2778 = vmatpush1.bf16.msra.mxu0 0
        %2779 = vmatprep.subr.bf16.mxu0 0
        %2780 = vmatpush1.bf16.msra.mxu0 0
        %2781 = vmatprep.subr.bf16.mxu0 0
        %2782 = vmatpush1.bf16.msra.mxu0 0
        %2783 = vmatprep.subr.bf16.mxu0 0
        %2784 = vmatpush1.bf16.msra.mxu0 0
        %2785 = vmatprep.subr.bf16.mxu0 0
        %2786 = vmatpush1.bf16.msra.mxu0 0
        %2787 = vmatprep.subr.bf16.mxu0 0
        %2788 = vmatpush1.bf16.msra.mxu0 0
        %2789 = vmatprep.subr.bf16.mxu0 0
        %2790 = vmatpush1.bf16.msra.mxu0 0
        %2791 = vmatprep.subr.bf16.mxu0 0
        %2792 = vmatpush1.bf16.msra.mxu0 0
        %2793 = vmatprep.mubr.bf16.mxu0 0
        %2794 = vmatmul.mubr.bf16.gmra.mrb[0].mxu0 %v2759
        %v2795 = vpop.f32.mrb[0].mxu0
        %v2796 = vadd.f32 %v2737, %v2795
        %v2797 = vpop.f32.mrb[0].mxu0
        %v2798 = vpop.f32.mrb[0].mxu0
        %v2799 = vadd.f32 %v2737, %v2798
        %v2800 = vpop.f32.mrb[0].mxu0
        %2801 = vdwg.mxu0
        %v2802 = vmax.f32 %v2796, 0.0
        %v2803 = vmax.f32 %v2799, 0.0
        %v2804 = vpack.c.bf16 %v2803, %v2802
        %v2805 = vld [vmem:[%s11] sm:$0xf]
        %v2806 = vld [vmem:[%s11 + $0x4] sm:$0xf]
        %v2807 = vld [vmem:[%s11 + $0x8] sm:$0xf]
        %v2808 = vld [vmem:[%s11 + $0xc] sm:$0xf]
        %v2809 = vld [vmem:[%s12] sm:$0x1]
        %v2811 = vlaneseq
        %v2812 = vshrl.u32 %v2811, 7
        %v2813 = vsub.s32 0, %v2812
        %v2814 = vrot.slane %v2809, %v2813
        %v2820 = vunpack.c.l.b16 %v2805
        %v2821 = vunpack.c.l.b16 %v2806
        %v2822 = vunpack.c.l.b16 %v2807
        %v2823 = vunpack.c.l.b16 %v2808
        %v2824 = vpack.c.b16 %v2821, %v2820
        %v2825 = vpack.c.b16 %v2823, %v2822
        %vm2828 = vcmask 261120
        %v2830 = vsel %vm2828, %v2804, 0
        %2832 = vmatprep.subr.bf16.mxu0 0
        %2833 = vmatpush1.bf16.msra.mxu0 %v2824
        %2834 = vmatprep.subr.bf16.mxu0 0
        %2835 = vmatpush1.bf16.msra.mxu0 %v2825
        %2836 = vmatprep.subr.bf16.mxu0 0
        %2837 = vmatpush1.bf16.msra.mxu0 0
        %2838 = vmatprep.subr.bf16.mxu0 0
        %2839 = vmatpush1.bf16.msra.mxu0 0
        %2840 = vmatprep.subr.bf16.mxu0 0
        %2841 = vmatpush1.bf16.msra.mxu0 0
        %2842 = vmatprep.subr.bf16.mxu0 0
        %2843 = vmatpush1.bf16.msra.mxu0 0
        %2844 = vmatprep.subr.bf16.mxu0 0
        %2845 = vmatpush1.bf16.msra.mxu0 0
        %2846 = vmatprep.subr.bf16.mxu0 0
        %2847 = vmatpush1.bf16.msra.mxu0 0
        %2848 = vmatprep.subr.bf16.mxu0 0
        %2849 = vmatpush1.bf16.msra.mxu0 0
        %2850 = vmatprep.subr.bf16.mxu0 0
        %2851 = vmatpush1.bf16.msra.mxu0 0
        %2852 = vmatprep.subr.bf16.mxu0 0
        %2853 = vmatpush1.bf16.msra.mxu0 0
        %2854 = vmatprep.subr.bf16.mxu0 0
        %2855 = vmatpush1.bf16.msra.mxu0 0
        %2856 = vmatprep.subr.bf16.mxu0 0
        %2857 = vmatpush1.bf16.msra.mxu0 0
        %2858 = vmatprep.subr.bf16.mxu0 0
        %2859 = vmatpush1.bf16.msra.mxu0 0
        %2860 = vmatprep.subr.bf16.mxu0 0
        %2861 = vmatpush1.bf16.msra.mxu0 0
        %2862 = vmatprep.subr.bf16.mxu0 0
        %2863 = vmatpush1.bf16.msra.mxu0 0
        %2864 = vmatprep.mubr.bf16.mxu0 0
        %2865 = vmatmul.mubr.bf16.gmra.mrb[0].mxu0 %v2830
        %v2866 = vpop.f32.mrb[0].mxu0
        %v2867 = vadd.f32 %v2814, %v2866
        %v2868 = vpop.f32.mrb[0].mxu0
        %v2869 = vpop.f32.mrb[0].mxu0
        %v2870 = vadd.f32 %v2814, %v2869
        %v2871 = vpop.f32.mrb[0].mxu0
        %2872 = vdwg.mxu0
        %2873 = vst [vmem:[%s436] sm:$0xff] %v2867
        %2874 = vst [vmem:[%s436 + $0x8] sm:$0xff] %v2870
        %s2875 = sand.u32 %s313, 1
        %s2876 = scalar_lea.sflag [#allocation3], %s2875
        %s2877 = sand.u32 %s313, 1
        %s2878 = smul.addr %s2877, 16
        %s2879 = scalar_lea.vmem [#allocation2], %s2878
        // Predicated region
        $region73: #{tpu_custom_call.1} parent=71 // pred_check
          %p2880 = pneg %p323
        $region74: #{tpu_custom_call.1} parent=71 // pred_check_branch
          %2882 = sbr.rel (%p2880) target = $region76
        $region75: #{tpu_custom_call.1} parent=71 // pred_region
          %s2883 = smul.u32 2, %s27
          %s2885 = ssub.s32 256, 256
          %2886 = vsyncadd %s2876, %s2885
          %s2887 = smul.addr %s2883, 128
          %s2888 = scalar_lea.hbm %s13, %s2887
          %s2889 = sshll.u32 %s2879, 4
          %s2890 = int_to_ptr.vmem [resolvable:$true] %s2889
          %2895 = dma.vmem_to_hbm [thread:$0]  %s2890, 256, %s2888, %s2876, 128, 128, 8
        $region76: #{tpu_custom_call.1} parent=71 // pred_fallthru
          _
      $region72: #{tpu_custom_call.1} parent=5 // pred_fallthru
        _
      %p2896 = scmp.le.s32.totalorder 2, %s22
      // Predicated region
      $region77: #{tpu_custom_call.1} parent=5 // pred_check
        %p2897 = pneg %p2896
      $region78: #{tpu_custom_call.1} parent=5 // pred_check_branch
        %2899 = sbr.rel (%p2897) target = $region80
      $region79: #{tpu_custom_call.1} parent=5 // pred_region
        %s2900 = ssub.s32 %s22, 2
        // Predicated region
        $region81: #{tpu_custom_call.1} parent=79 // pred_check
          %p2901 = pneg %p329
        $region82: #{tpu_custom_call.1} parent=79 // pred_check_branch
          %2903 = sbr.rel (%p2901) target = $region84
        $region83: #{tpu_custom_call.1} parent=79 // pred_region
          %s2904 = sand.u32 %s314, 1
          %s2905 = scalar_lea.sflag [#allocation3], %s2904
          %s2906 = sand.u32 %s314, 1
          %s2907 = smul.addr %s2906, 16
          %s2908 = scalar_lea.vmem [#allocation2], %s2907
          %2909 = dma.done %s2905, 256
        $region84: #{tpu_custom_call.1} parent=79 // pred_fallthru
          _
      $region80: #{tpu_custom_call.1} parent=5 // pred_fallthru
        _
    $region6: #{tpu_custom_call.1} parent=1 // loop_footer
      %s26 = sadd.s32 1, %s22
    $region7: #{tpu_custom_call.1} parent=1 // loop_footer_branch
      %21 = sbr.rel target = $region3
    $region8: #{tpu_custom_call.1} parent=1 // loop_exit
      _
    %2910 = vsyncpa [#allocation3], 1
    %s2911 = scalar_lea.sflag [#allocation3], 1
    %2912 = vsyncpa %s2911, 1

</llo_original>
